<compile_context>
chip_gen: v7x
topology: tpu7x:2x2x1
jax: 0.10.0
libtpu: 0.0.40
codegen_flags: <defaults>
</compile_context>

<pallas_src>
import jax
import jax.numpy as jnp
import numpy as np
from jax import lax
from jax.experimental import pallas as pl
from jax.experimental.pallas import tpu as pltpu

BN_EPS = 1e-5
LEAKY_SLOPE = 0.01  # torch.nn.LeakyReLU default negative_slope
LANE = 128


def _branch_block_kernel(x_ref, w_emb_ref, bn_ref, w_fc_ref, b_fc_ref,
                         emb_ref, pred_ref):
    """One grid step == BR_BLK branches."""
    br_blk = w_emb_ref.shape[0]

    # Shared activations; cast once to bf16 for the MXU (weights are bf16).
    x = x_ref[...].astype(jnp.bfloat16)          # (B, d_in)
    bn = bn_ref[...]                              # (br_blk, 2, d_out) f32
    bfc = b_fc_ref[...]                           # (br_blk, 1, ncls)  f32

    # Static unroll over the small branch block (full LLO visibility).
    for r in range(br_blk):
        # --- embedding Linear (bias dropped: cancelled exactly by BN mean) ---
        h = jnp.dot(x, w_emb_ref[r], preferred_element_type=jnp.float32)

        # --- BatchNorm1d (training mode: batch mean, biased variance), f32 ---
        mean = jnp.mean(h, axis=0, keepdims=True)
        c = h - mean
        var = jnp.mean(c * c, axis=0, keepdims=True)
        h = c * lax.rsqrt(var + BN_EPS)
        h = h * bn[r, 0:1, :] + bn[r, 1:2, :]     # gamma / beta

        # --- LeakyReLU ---
        h = jnp.where(h >= 0, h, LEAKY_SLOPE * h)

        # --- L2 normalize over features (dim=1) ---
        ss = jnp.sum(h * h, axis=1, keepdims=True)
        e = h * lax.rsqrt(ss)
        emb_ref[r] = e

        # --- fc head (bf16 operands, f32 accumulation) ---
        p = jnp.dot(e.astype(jnp.bfloat16), w_fc_ref[r],
                    preferred_element_type=jnp.float32)
        pred_ref[r] = p + bfc[r]


def _pick_branch_block(branches):
    # Keep the grid length >= 2 when possible (v7x has 2 TensorCores) while
    # amortizing per-step overhead; cap the block at 8 branches.
    if branches <= 1:
        return 1
    return max(1, min(8, branches // 2))


def branchnet_forward(x, params, *, br_blk=None):
    """Pallas implementation of _BranchNet.forward."""
    w_emb, b_emb, gamma, beta, w_fc, b_fc = params  # b_emb unused (BN cancels it)
    branches, d_in, d_out = w_emb.shape
    nclasses = w_fc.shape[-1]
    B = x.shape[0]

    f32, bf16 = jnp.float32, jnp.bfloat16

    if br_blk is None:
        br_blk = _pick_branch_block(branches)
    n_blocks = -(-branches // br_blk)
    br_pad = n_blocks * br_blk

    # Lane-dense pred output: pad nclasses up to a multiple of 128.
    ncls_pad = -(-nclasses // LANE) * LANE

    def pad_branch(a):
        if br_pad == branches:
            return a
        pad = [(0, br_pad - branches)] + [(0, 0)] * (a.ndim - 1)
        return jnp.pad(a, pad)

    # Weights streamed as bf16 (halves HBM bytes); accumulation stays f32.
    # TODO(synk): on v7x, fp8 weight streaming would halve bytes again if the
    # application's accuracy budget allows.
    w_emb_k = pad_branch(w_emb.astype(bf16))
    w_fc_k = w_fc.astype(bf16)
    b_fc_k = b_fc.astype(f32)
    if ncls_pad != nclasses:
        w_fc_k = jnp.pad(w_fc_k, ((0, 0), (0, 0), (0, ncls_pad - nclasses)))
        b_fc_k = jnp.pad(b_fc_k, ((0, 0), (0, 0), (0, ncls_pad - nclasses)))
    w_fc_k = pad_branch(w_fc_k)
    b_fc_k = pad_branch(b_fc_k)

    # Pack gamma/beta into one per-branch array -> a single small DMA per block.
    bn_k = pad_branch(jnp.concatenate([gamma.astype(f32), beta.astype(f32)],
                                      axis=1))                 # (br_pad, 2, d_out)

    emb, pred = pl.pallas_call(
        _branch_block_kernel,
        out_shape=(
            jax.ShapeDtypeStruct((br_pad, B, d_out), f32),
            jax.ShapeDtypeStruct((br_pad, B, ncls_pad), f32),
        ),
        grid_spec=pltpu.PrefetchScalarGridSpec(
            num_scalar_prefetch=0,
            grid=(n_blocks,),
            in_specs=[
                pl.BlockSpec((B, d_in), lambda i: (0, 0)),                  # x (shared)
                pl.BlockSpec((br_blk, d_in, d_out), lambda i: (i, 0, 0)),   # w_emb bf16
                pl.BlockSpec((br_blk, 2, d_out), lambda i: (i, 0, 0)),      # gamma/beta
                pl.BlockSpec((br_blk, d_out, ncls_pad), lambda i: (i, 0, 0)),  # w_fc bf16
                pl.BlockSpec((br_blk, 1, ncls_pad), lambda i: (i, 0, 0)),   # b_fc
            ],
            out_specs=[
                pl.BlockSpec((br_blk, B, d_out), lambda i: (i, 0, 0)),
                pl.BlockSpec((br_blk, B, ncls_pad), lambda i: (i, 0, 0)),
            ],
        ),
        compiler_params=pltpu.CompilerParams(
            dimension_semantics=("parallel",),
            # 32 MiB: within v7x's 64 MiB physical VMEM, raises v5e's 16 MiB
            # scoped default; actual per-step footprint here is << 1 MiB.
            vmem_limit_bytes=32 * 1024 * 1024,
        ),
    )(x.astype(f32), w_emb_k, bn_k, w_fc_k, b_fc_k)

    # Drop branch / lane padding.
    emb = emb[:branches]
    pred = pred[:branches, :, :nclasses]

    # torch: stack along dim=1, then .squeeze_() (drops every size-1 dim).
    embs = jnp.squeeze(jnp.transpose(emb, (1, 0, 2)))
    preds = jnp.squeeze(jnp.transpose(pred, (1, 0, 2)))
    return embs, preds


def init_params(key, branches, d_in, d_out, nclasses):
    """Deterministic synthetic params shaped like torch.nn.Linear / BatchNorm1d."""
    k = jax.random.split(key, 4)
    bound_e = 1.0 / np.sqrt(d_in)
    bound_f = 1.0 / np.sqrt(d_out)
    w_emb = jax.random.uniform(k[0], (branches, d_in, d_out), jnp.float32,
                               -bound_e, bound_e)
    b_emb = jax.random.uniform(k[1], (branches, 1, d_out), jnp.float32,
                               -bound_e, bound_e)
    gamma = jnp.ones((branches, 1, d_out), jnp.float32)   # BN default init
    beta = jnp.zeros((branches, 1, d_out), jnp.float32)
    w_fc = jax.random.uniform(k[2], (branches, d_out, nclasses), jnp.float32,
                              -bound_f, bound_f)
    b_fc = jax.random.uniform(k[3], (branches, 1, nclasses), jnp.float32,
                              -bound_f, bound_f)
    return w_emb, b_emb, gamma, beta, w_fc, b_fc


def branchnet_reference(x, params):
    """Pure-JAX reference matching the torch forward pass.

    Mirrors the kernel's precision policy (bf16 matmul operands, f32
    accumulation and elementwise math) so the comparison isolates kernel
    bugs rather than quantization.  Keeps the embedding bias: training-mode
    BN cancels it, so the kernel (which drops it) must still agree.
    """
    w_emb, b_emb, gamma, beta, w_fc, b_fc = params
    xb = x.astype(jnp.bfloat16)
    embs, preds = [], []
    for br in range(w_emb.shape[0]):
        h = jnp.dot(xb, w_emb[br].astype(jnp.bfloat16),
                    preferred_element_type=jnp.float32) + b_emb[br]
        mean = jnp.mean(h, axis=0, keepdims=True)
        var = jnp.mean((h - mean) ** 2, axis=0, keepdims=True)
        h = (h - mean) / jnp.sqrt(var + BN_EPS) * gamma[br] + beta[br]
        h = jnp.where(h >= 0, h, LEAKY_SLOPE * h)
        h = h / jnp.linalg.norm(h, axis=1, keepdims=True)
        embs.append(h)
        preds.append(jnp.dot(h.astype(jnp.bfloat16),
                             w_fc[br].astype(jnp.bfloat16),
                             preferred_element_type=jnp.float32) + b_fc[br])
    embs = jnp.squeeze(jnp.stack(embs, axis=1))
    preds = jnp.squeeze(jnp.stack(preds, axis=1))
    return embs, preds


if __name__ == "__main__":
    # Small shapes consistent with _BranchNet; 8 branches so branch-blocking
    # (BR_BLK=4, grid=2) is actually exercised.  B kept small per spec; real
    # deployments should batch toward 128+ rows for MXU utilization.
    B, D_IN, D_OUT, NCLASSES, BRANCHES = 8, 128, 128, 128, 8

    key = jax.random.PRNGKey(0)
    kx, kp = jax.random.split(key)
    x = jax.random.normal(kx, (B, D_IN), jnp.float32)
    params = init_params(kp, BRANCHES, D_IN, D_OUT, NCLASSES)

    embs, preds = branchnet_forward(x, params)
    embs = jax.block_until_ready(embs)
    preds = jax.block_until_ready(preds)

    ref_embs, ref_preds = branchnet_reference(x, params)
    # Tolerance accounts for bf16 activation quantization at the fc input
    # (worst-case ~1e-4); genuine kernel bugs are orders of magnitude larger.
    np.testing.assert_allclose(np.asarray(embs), np.asarray(ref_embs),
                               rtol=1e-3, atol=1e-3)
    np.testing.assert_allclose(np.asarray(preds), np.asarray(ref_preds),
                               rtol=1e-3, atol=1e-3)

    print("KERNEL_OK")
</pallas_src>

<mosaic_0001>
module attributes {stable_mosaic.version = 11 : i64} {
  func.func @_branch_block_kernel(%arg0: i32, %arg1: memref<8x128xf32, #tpu.memory_space<vmem>>, %arg2: memref<4x128x128xbf16, #tpu.memory_space<vmem>>, %arg3: memref<4x2x128xf32, #tpu.memory_space<vmem>>, %arg4: memref<4x128x128xbf16, #tpu.memory_space<vmem>>, %arg5: memref<4x1x128xf32, #tpu.memory_space<vmem>>, %arg6: memref<4x8x128xf32, #tpu.memory_space<vmem>>, %arg7: memref<4x8x128xf32, #tpu.memory_space<vmem>>) attributes {dimension_semantics = [#tpu.dimension_semantics<parallel>], iteration_bounds = array<i64: 2>, scalar_prefetch = 0 : i64, scratch_operands = 0 : i64, tpu.core_type = #tpu.core_type<tc>, window_params = [{pipeline_mode = #tpu.pipeline_mode<synchronous>, transform_indices = @transform_0, window_bounds = array<i64: 8, 128>}, {transform_indices = @transform_1, window_bounds = array<i64: 4, 128, 128>}, {transform_indices = @transform_2, window_bounds = array<i64: 4, 2, 128>}, {transform_indices = @transform_3, window_bounds = array<i64: 4, 128, 128>}, {transform_indices = @transform_4, window_bounds = array<i64: 4, 1, 128>}, {transform_indices = @transform_5, window_bounds = array<i64: 4, 8, 128>}, {transform_indices = @transform_6, window_bounds = array<i64: 4, 8, 128>}]} {
    %c0 = arith.constant 0 : index
    %c0_0 = arith.constant 0 : index
    %0 = vector.load %arg1[%c0, %c0_0] : memref<8x128xf32, #tpu.memory_space<vmem>>, vector<8x128xf32>
    %1 = arith.truncf %0 : vector<8x128xf32> to vector<8x128xbf16>
    %c0_1 = arith.constant 0 : index
    %c0_2 = arith.constant 0 : index
    %c0_3 = arith.constant 0 : index
    %2 = vector.load %arg3[%c0_1, %c0_2, %c0_3] : memref<4x2x128xf32, #tpu.memory_space<vmem>>, vector<4x2x128xf32>
    %c0_4 = arith.constant 0 : index
    %c0_5 = arith.constant 0 : index
    %c0_6 = arith.constant 0 : index
    %3 = vector.load %arg5[%c0_4, %c0_5, %c0_6] : memref<4x1x128xf32, #tpu.memory_space<vmem>>, vector<4x1x128xf32>
    %c0_7 = arith.constant 0 : index
    %c0_8 = arith.constant 0 : index
    %c0_9 = arith.constant 0 : index
    %4 = vector.load %arg2[%c0_7, %c0_8, %c0_9] : memref<4x128x128xbf16, #tpu.memory_space<vmem>>, vector<1x128x128xbf16>
    %5 = vector.shape_cast %4 : vector<1x128x128xbf16> to vector<128x128xbf16>
    %cst = arith.constant dense<0.000000e+00> : vector<8x128xf32>
    %6 = tpu.matmul %1, %5, %cst {dimension_numbers = #tpu.dot_dimension_numbers<[1], [0], [0], [1], [0, 0, 1, 1], [], []>} : vector<8x128xbf16>, vector<128x128xbf16>, vector<8x128xf32> -> vector<8x128xf32>
    %cst_10 = arith.constant dense<0.000000e+00> : vector<128xf32>
    %7 = vector.multi_reduction <add>, %6, %cst_10 [0] : vector<8x128xf32> to vector<128xf32>
    %8 = vector.shape_cast %7 : vector<128xf32> to vector<1x128xf32>
    %cst_11 = arith.constant 8.000000e+00 : f32
    %9 = vector.broadcast %cst_11 : f32 to vector<1x128xf32>
    %10 = arith.divf %8, %9 : vector<1x128xf32>
    %11 = vector.broadcast %10 : vector<1x128xf32> to vector<8x128xf32>
    %12 = arith.subf %6, %11 : vector<8x128xf32>
    %13 = arith.mulf %12, %12 : vector<8x128xf32>
    %cst_12 = arith.constant dense<0.000000e+00> : vector<128xf32>
    %14 = vector.multi_reduction <add>, %13, %cst_12 [0] : vector<8x128xf32> to vector<128xf32>
    %15 = vector.shape_cast %14 : vector<128xf32> to vector<1x128xf32>
    %cst_13 = arith.constant 8.000000e+00 : f32
    %16 = vector.broadcast %cst_13 : f32 to vector<1x128xf32>
    %17 = arith.divf %15, %16 : vector<1x128xf32>
    %cst_14 = arith.constant 9.99999974E-6 : f32
    %18 = vector.broadcast %cst_14 : f32 to vector<1x128xf32>
    %19 = arith.addf %17, %18 : vector<1x128xf32>
    %20 = math.rsqrt %19 : vector<1x128xf32>
    %21 = vector.broadcast %20 : vector<1x128xf32> to vector<8x128xf32>
    %22 = arith.mulf %12, %21 : vector<8x128xf32>
    %23 = vector.extract_strided_slice %2 {offsets = [0, 0, 0], sizes = [1, 1, 128], strides = [1, 1, 1]} : vector<4x2x128xf32> to vector<1x1x128xf32>
    %24 = vector.shape_cast %23 : vector<1x1x128xf32> to vector<1x128xf32>
    %25 = vector.broadcast %24 : vector<1x128xf32> to vector<8x128xf32>
    %26 = arith.mulf %22, %25 : vector<8x128xf32>
    %27 = vector.extract_strided_slice %2 {offsets = [0, 1, 0], sizes = [1, 1, 128], strides = [1, 1, 1]} : vector<4x2x128xf32> to vector<1x1x128xf32>
    %28 = vector.shape_cast %27 : vector<1x1x128xf32> to vector<1x128xf32>
    %29 = vector.broadcast %28 : vector<1x128xf32> to vector<8x128xf32>
    %30 = arith.addf %26, %29 : vector<8x128xf32>
    %cst_15 = arith.constant 0.000000e+00 : f32
    %31 = vector.broadcast %cst_15 : f32 to vector<8x128xf32>
    %32 = arith.cmpf oge, %30, %31 : vector<8x128xf32>
    %cst_16 = arith.constant 0.00999999977 : f32
    %33 = vector.broadcast %cst_16 : f32 to vector<8x128xf32>
    %34 = arith.mulf %33, %30 : vector<8x128xf32>
    %35 = arith.select %32, %30, %34 : vector<8x128xi1>, vector<8x128xf32>
    %36 = arith.mulf %35, %35 : vector<8x128xf32>
    %cst_17 = arith.constant dense<0.000000e+00> : vector<8xf32>
    %37 = vector.multi_reduction <add>, %36, %cst_17 [1] : vector<8x128xf32> to vector<8xf32>
    %38 = vector.shape_cast %37 : vector<8xf32> to vector<8x1xf32>
    %39 = math.rsqrt %38 : vector<8x1xf32>
    %40 = vector.broadcast %39 : vector<8x1xf32> to vector<8x128xf32>
    %41 = arith.mulf %35, %40 : vector<8x128xf32>
    %c0_18 = arith.constant 0 : index
    %c0_19 = arith.constant 0 : index
    %c0_20 = arith.constant 0 : index
    %42 = vector.load %arg6[%c0_18, %c0_19, %c0_20] : memref<4x8x128xf32, #tpu.memory_space<vmem>>, vector<1x8x128xf32>
    %43 = vector.shape_cast %42 : vector<1x8x128xf32> to vector<8x128xf32>
    %44 = vector.shape_cast %41 : vector<8x128xf32> to vector<1x8x128xf32>
    tpu.vector_store %arg6[%c0_18, %c0_19, %c0_20], %44 {strides = array<i32>} : memref<4x8x128xf32, #tpu.memory_space<vmem>>, vector<1x8x128xf32>,
    %45 = arith.truncf %41 : vector<8x128xf32> to vector<8x128xbf16>
    %c0_21 = arith.constant 0 : index
    %c0_22 = arith.constant 0 : index
    %c0_23 = arith.constant 0 : index
    %46 = vector.load %arg4[%c0_21, %c0_22, %c0_23] : memref<4x128x128xbf16, #tpu.memory_space<vmem>>, vector<1x128x128xbf16>
    %47 = vector.shape_cast %46 : vector<1x128x128xbf16> to vector<128x128xbf16>
    %cst_24 = arith.constant dense<0.000000e+00> : vector<8x128xf32>
    %48 = tpu.matmul %45, %47, %cst_24 {dimension_numbers = #tpu.dot_dimension_numbers<[1], [0], [0], [1], [0, 0, 1, 1], [], []>} : vector<8x128xbf16>, vector<128x128xbf16>, vector<8x128xf32> -> vector<8x128xf32>
    %49 = vector.extract_strided_slice %3 {offsets = [0, 0, 0], sizes = [1, 1, 128], strides = [1, 1, 1]} : vector<4x1x128xf32> to vector<1x1x128xf32>
    %50 = vector.shape_cast %49 : vector<1x1x128xf32> to vector<1x128xf32>
    %51 = vector.broadcast %50 : vector<1x128xf32> to vector<8x128xf32>
    %52 = arith.addf %48, %51 : vector<8x128xf32>
    %c0_25 = arith.constant 0 : index
    %c0_26 = arith.constant 0 : index
    %c0_27 = arith.constant 0 : index
    %53 = vector.load %arg7[%c0_25, %c0_26, %c0_27] : memref<4x8x128xf32, #tpu.memory_space<vmem>>, vector<1x8x128xf32>
    %54 = vector.shape_cast %53 : vector<1x8x128xf32> to vector<8x128xf32>
    %55 = vector.shape_cast %52 : vector<8x128xf32> to vector<1x8x128xf32>
    tpu.vector_store %arg7[%c0_25, %c0_26, %c0_27], %55 {strides = array<i32>} : memref<4x8x128xf32, #tpu.memory_space<vmem>>, vector<1x8x128xf32>,
    %c1 = arith.constant 1 : index
    %c0_28 = arith.constant 0 : index
    %c0_29 = arith.constant 0 : index
    %56 = vector.load %arg2[%c1, %c0_28, %c0_29] : memref<4x128x128xbf16, #tpu.memory_space<vmem>>, vector<1x128x128xbf16>
    %57 = vector.shape_cast %56 : vector<1x128x128xbf16> to vector<128x128xbf16>
    %cst_30 = arith.constant dense<0.000000e+00> : vector<8x128xf32>
    %58 = tpu.matmul %1, %57, %cst_30 {dimension_numbers = #tpu.dot_dimension_numbers<[1], [0], [0], [1], [0, 0, 1, 1], [], []>} : vector<8x128xbf16>, vector<128x128xbf16>, vector<8x128xf32> -> vector<8x128xf32>
    %cst_31 = arith.constant dense<0.000000e+00> : vector<128xf32>
    %59 = vector.multi_reduction <add>, %58, %cst_31 [0] : vector<8x128xf32> to vector<128xf32>
    %60 = vector.shape_cast %59 : vector<128xf32> to vector<1x128xf32>
    %cst_32 = arith.constant 8.000000e+00 : f32
    %61 = vector.broadcast %cst_32 : f32 to vector<1x128xf32>
    %62 = arith.divf %60, %61 : vector<1x128xf32>
    %63 = vector.broadcast %62 : vector<1x128xf32> to vector<8x128xf32>
    %64 = arith.subf %58, %63 : vector<8x128xf32>
    %65 = arith.mulf %64, %64 : vector<8x128xf32>
    %cst_33 = arith.constant dense<0.000000e+00> : vector<128xf32>
    %66 = vector.multi_reduction <add>, %65, %cst_33 [0] : vector<8x128xf32> to vector<128xf32>
    %67 = vector.shape_cast %66 : vector<128xf32> to vector<1x128xf32>
    %cst_34 = arith.constant 8.000000e+00 : f32
    %68 = vector.broadcast %cst_34 : f32 to vector<1x128xf32>
    %69 = arith.divf %67, %68 : vector<1x128xf32>
    %cst_35 = arith.constant 9.99999974E-6 : f32
    %70 = vector.broadcast %cst_35 : f32 to vector<1x128xf32>
    %71 = arith.addf %69, %70 : vector<1x128xf32>
    %72 = math.rsqrt %71 : vector<1x128xf32>
    %73 = vector.broadcast %72 : vector<1x128xf32> to vector<8x128xf32>
    %74 = arith.mulf %64, %73 : vector<8x128xf32>
    %75 = vector.extract_strided_slice %2 {offsets = [1, 0, 0], sizes = [1, 1, 128], strides = [1, 1, 1]} : vector<4x2x128xf32> to vector<1x1x128xf32>
    %76 = vector.shape_cast %75 : vector<1x1x128xf32> to vector<1x128xf32>
    %77 = vector.broadcast %76 : vector<1x128xf32> to vector<8x128xf32>
    %78 = arith.mulf %74, %77 : vector<8x128xf32>
    %79 = vector.extract_strided_slice %2 {offsets = [1, 1, 0], sizes = [1, 1, 128], strides = [1, 1, 1]} : vector<4x2x128xf32> to vector<1x1x128xf32>
    %80 = vector.shape_cast %79 : vector<1x1x128xf32> to vector<1x128xf32>
    %81 = vector.broadcast %80 : vector<1x128xf32> to vector<8x128xf32>
    %82 = arith.addf %78, %81 : vector<8x128xf32>
    %cst_36 = arith.constant 0.000000e+00 : f32
    %83 = vector.broadcast %cst_36 : f32 to vector<8x128xf32>
    %84 = arith.cmpf oge, %82, %83 : vector<8x128xf32>
    %cst_37 = arith.constant 0.00999999977 : f32
    %85 = vector.broadcast %cst_37 : f32 to vector<8x128xf32>
    %86 = arith.mulf %85, %82 : vector<8x128xf32>
    %87 = arith.select %84, %82, %86 : vector<8x128xi1>, vector<8x128xf32>
    %88 = arith.mulf %87, %87 : vector<8x128xf32>
    %cst_38 = arith.constant dense<0.000000e+00> : vector<8xf32>
    %89 = vector.multi_reduction <add>, %88, %cst_38 [1] : vector<8x128xf32> to vector<8xf32>
    %90 = vector.shape_cast %89 : vector<8xf32> to vector<8x1xf32>
    %91 = math.rsqrt %90 : vector<8x1xf32>
    %92 = vector.broadcast %91 : vector<8x1xf32> to vector<8x128xf32>
    %93 = arith.mulf %87, %92 : vector<8x128xf32>
    %c1_39 = arith.constant 1 : index
    %c0_40 = arith.constant 0 : index
    %c0_41 = arith.constant 0 : index
    %94 = vector.load %arg6[%c1_39, %c0_40, %c0_41] : memref<4x8x128xf32, #tpu.memory_space<vmem>>, vector<1x8x128xf32>
    %95 = vector.shape_cast %94 : vector<1x8x128xf32> to vector<8x128xf32>
    %96 = vector.shape_cast %93 : vector<8x128xf32> to vector<1x8x128xf32>
    tpu.vector_store %arg6[%c1_39, %c0_40, %c0_41], %96 {strides = array<i32>} : memref<4x8x128xf32, #tpu.memory_space<vmem>>, vector<1x8x128xf32>,
    %97 = arith.truncf %93 : vector<8x128xf32> to vector<8x128xbf16>
    %c1_42 = arith.constant 1 : index
    %c0_43 = arith.constant 0 : index
    %c0_44 = arith.constant 0 : index
    %98 = vector.load %arg4[%c1_42, %c0_43, %c0_44] : memref<4x128x128xbf16, #tpu.memory_space<vmem>>, vector<1x128x128xbf16>
    %99 = vector.shape_cast %98 : vector<1x128x128xbf16> to vector<128x128xbf16>
    %cst_45 = arith.constant dense<0.000000e+00> : vector<8x128xf32>
    %100 = tpu.matmul %97, %99, %cst_45 {dimension_numbers = #tpu.dot_dimension_numbers<[1], [0], [0], [1], [0, 0, 1, 1], [], []>} : vector<8x128xbf16>, vector<128x128xbf16>, vector<8x128xf32> -> vector<8x128xf32>
    %101 = vector.extract_strided_slice %3 {offsets = [1, 0, 0], sizes = [1, 1, 128], strides = [1, 1, 1]} : vector<4x1x128xf32> to vector<1x1x128xf32>
    %102 = vector.shape_cast %101 : vector<1x1x128xf32> to vector<1x128xf32>
    %103 = vector.broadcast %102 : vector<1x128xf32> to vector<8x128xf32>
    %104 = arith.addf %100, %103 : vector<8x128xf32>
    %c1_46 = arith.constant 1 : index
    %c0_47 = arith.constant 0 : index
    %c0_48 = arith.constant 0 : index
    %105 = vector.load %arg7[%c1_46, %c0_47, %c0_48] : memref<4x8x128xf32, #tpu.memory_space<vmem>>, vector<1x8x128xf32>
    %106 = vector.shape_cast %105 : vector<1x8x128xf32> to vector<8x128xf32>
    %107 = vector.shape_cast %104 : vector<8x128xf32> to vector<1x8x128xf32>
    tpu.vector_store %arg7[%c1_46, %c0_47, %c0_48], %107 {strides = array<i32>} : memref<4x8x128xf32, #tpu.memory_space<vmem>>, vector<1x8x128xf32>,
    %c2 = arith.constant 2 : index
    %c0_49 = arith.constant 0 : index
    %c0_50 = arith.constant 0 : index
    %108 = vector.load %arg2[%c2, %c0_49, %c0_50] : memref<4x128x128xbf16, #tpu.memory_space<vmem>>, vector<1x128x128xbf16>
    %109 = vector.shape_cast %108 : vector<1x128x128xbf16> to vector<128x128xbf16>
    %cst_51 = arith.constant dense<0.000000e+00> : vector<8x128xf32>
    %110 = tpu.matmul %1, %109, %cst_51 {dimension_numbers = #tpu.dot_dimension_numbers<[1], [0], [0], [1], [0, 0, 1, 1], [], []>} : vector<8x128xbf16>, vector<128x128xbf16>, vector<8x128xf32> -> vector<8x128xf32>
    %cst_52 = arith.constant dense<0.000000e+00> : vector<128xf32>
    %111 = vector.multi_reduction <add>, %110, %cst_52 [0] : vector<8x128xf32> to vector<128xf32>
    %112 = vector.shape_cast %111 : vector<128xf32> to vector<1x128xf32>
    %cst_53 = arith.constant 8.000000e+00 : f32
    %113 = vector.broadcast %cst_53 : f32 to vector<1x128xf32>
    %114 = arith.divf %112, %113 : vector<1x128xf32>
    %115 = vector.broadcast %114 : vector<1x128xf32> to vector<8x128xf32>
    %116 = arith.subf %110, %115 : vector<8x128xf32>
    %117 = arith.mulf %116, %116 : vector<8x128xf32>
    %cst_54 = arith.constant dense<0.000000e+00> : vector<128xf32>
    %118 = vector.multi_reduction <add>, %117, %cst_54 [0] : vector<8x128xf32> to vector<128xf32>
    %119 = vector.shape_cast %118 : vector<128xf32> to vector<1x128xf32>
    %cst_55 = arith.constant 8.000000e+00 : f32
    %120 = vector.broadcast %cst_55 : f32 to vector<1x128xf32>
    %121 = arith.divf %119, %120 : vector<1x128xf32>
    %cst_56 = arith.constant 9.99999974E-6 : f32
    %122 = vector.broadcast %cst_56 : f32 to vector<1x128xf32>
    %123 = arith.addf %121, %122 : vector<1x128xf32>
    %124 = math.rsqrt %123 : vector<1x128xf32>
    %125 = vector.broadcast %124 : vector<1x128xf32> to vector<8x128xf32>
    %126 = arith.mulf %116, %125 : vector<8x128xf32>
    %127 = vector.extract_strided_slice %2 {offsets = [2, 0, 0], sizes = [1, 1, 128], strides = [1, 1, 1]} : vector<4x2x128xf32> to vector<1x1x128xf32>
    %128 = vector.shape_cast %127 : vector<1x1x128xf32> to vector<1x128xf32>
    %129 = vector.broadcast %128 : vector<1x128xf32> to vector<8x128xf32>
    %130 = arith.mulf %126, %129 : vector<8x128xf32>
    %131 = vector.extract_strided_slice %2 {offsets = [2, 1, 0], sizes = [1, 1, 128], strides = [1, 1, 1]} : vector<4x2x128xf32> to vector<1x1x128xf32>
    %132 = vector.shape_cast %131 : vector<1x1x128xf32> to vector<1x128xf32>
    %133 = vector.broadcast %132 : vector<1x128xf32> to vector<8x128xf32>
    %134 = arith.addf %130, %133 : vector<8x128xf32>
    %cst_57 = arith.constant 0.000000e+00 : f32
    %135 = vector.broadcast %cst_57 : f32 to vector<8x128xf32>
    %136 = arith.cmpf oge, %134, %135 : vector<8x128xf32>
    %cst_58 = arith.constant 0.00999999977 : f32
    %137 = vector.broadcast %cst_58 : f32 to vector<8x128xf32>
    %138 = arith.mulf %137, %134 : vector<8x128xf32>
    %139 = arith.select %136, %134, %138 : vector<8x128xi1>, vector<8x128xf32>
    %140 = arith.mulf %139, %139 : vector<8x128xf32>
    %cst_59 = arith.constant dense<0.000000e+00> : vector<8xf32>
    %141 = vector.multi_reduction <add>, %140, %cst_59 [1] : vector<8x128xf32> to vector<8xf32>
    %142 = vector.shape_cast %141 : vector<8xf32> to vector<8x1xf32>
    %143 = math.rsqrt %142 : vector<8x1xf32>
    %144 = vector.broadcast %143 : vector<8x1xf32> to vector<8x128xf32>
    %145 = arith.mulf %139, %144 : vector<8x128xf32>
    %c2_60 = arith.constant 2 : index
    %c0_61 = arith.constant 0 : index
    %c0_62 = arith.constant 0 : index
    %146 = vector.load %arg6[%c2_60, %c0_61, %c0_62] : memref<4x8x128xf32, #tpu.memory_space<vmem>>, vector<1x8x128xf32>
    %147 = vector.shape_cast %146 : vector<1x8x128xf32> to vector<8x128xf32>
    %148 = vector.shape_cast %145 : vector<8x128xf32> to vector<1x8x128xf32>
    tpu.vector_store %arg6[%c2_60, %c0_61, %c0_62], %148 {strides = array<i32>} : memref<4x8x128xf32, #tpu.memory_space<vmem>>, vector<1x8x128xf32>,
    %149 = arith.truncf %145 : vector<8x128xf32> to vector<8x128xbf16>
    %c2_63 = arith.constant 2 : index
    %c0_64 = arith.constant 0 : index
    %c0_65 = arith.constant 0 : index
    %150 = vector.load %arg4[%c2_63, %c0_64, %c0_65] : memref<4x128x128xbf16, #tpu.memory_space<vmem>>, vector<1x128x128xbf16>
    %151 = vector.shape_cast %150 : vector<1x128x128xbf16> to vector<128x128xbf16>
    %cst_66 = arith.constant dense<0.000000e+00> : vector<8x128xf32>
    %152 = tpu.matmul %149, %151, %cst_66 {dimension_numbers = #tpu.dot_dimension_numbers<[1], [0], [0], [1], [0, 0, 1, 1], [], []>} : vector<8x128xbf16>, vector<128x128xbf16>, vector<8x128xf32> -> vector<8x128xf32>
    %153 = vector.extract_strided_slice %3 {offsets = [2, 0, 0], sizes = [1, 1, 128], strides = [1, 1, 1]} : vector<4x1x128xf32> to vector<1x1x128xf32>
    %154 = vector.shape_cast %153 : vector<1x1x128xf32> to vector<1x128xf32>
    %155 = vector.broadcast %154 : vector<1x128xf32> to vector<8x128xf32>
    %156 = arith.addf %152, %155 : vector<8x128xf32>
    %c2_67 = arith.constant 2 : index
    %c0_68 = arith.constant 0 : index
    %c0_69 = arith.constant 0 : index
    %157 = vector.load %arg7[%c2_67, %c0_68, %c0_69] : memref<4x8x128xf32, #tpu.memory_space<vmem>>, vector<1x8x128xf32>
    %158 = vector.shape_cast %157 : vector<1x8x128xf32> to vector<8x128xf32>
    %159 = vector.shape_cast %156 : vector<8x128xf32> to vector<1x8x128xf32>
    tpu.vector_store %arg7[%c2_67, %c0_68, %c0_69], %159 {strides = array<i32>} : memref<4x8x128xf32, #tpu.memory_space<vmem>>, vector<1x8x128xf32>,
    %c3 = arith.constant 3 : index
    %c0_70 = arith.constant 0 : index
    %c0_71 = arith.constant 0 : index
    %160 = vector.load %arg2[%c3, %c0_70, %c0_71] : memref<4x128x128xbf16, #tpu.memory_space<vmem>>, vector<1x128x128xbf16>
    %161 = vector.shape_cast %160 : vector<1x128x128xbf16> to vector<128x128xbf16>
    %cst_72 = arith.constant dense<0.000000e+00> : vector<8x128xf32>
    %162 = tpu.matmul %1, %161, %cst_72 {dimension_numbers = #tpu.dot_dimension_numbers<[1], [0], [0], [1], [0, 0, 1, 1], [], []>} : vector<8x128xbf16>, vector<128x128xbf16>, vector<8x128xf32> -> vector<8x128xf32>
    %cst_73 = arith.constant dense<0.000000e+00> : vector<128xf32>
    %163 = vector.multi_reduction <add>, %162, %cst_73 [0] : vector<8x128xf32> to vector<128xf32>
    %164 = vector.shape_cast %163 : vector<128xf32> to vector<1x128xf32>
    %cst_74 = arith.constant 8.000000e+00 : f32
    %165 = vector.broadcast %cst_74 : f32 to vector<1x128xf32>
    %166 = arith.divf %164, %165 : vector<1x128xf32>
    %167 = vector.broadcast %166 : vector<1x128xf32> to vector<8x128xf32>
    %168 = arith.subf %162, %167 : vector<8x128xf32>
    %169 = arith.mulf %168, %168 : vector<8x128xf32>
    %cst_75 = arith.constant dense<0.000000e+00> : vector<128xf32>
    %170 = vector.multi_reduction <add>, %169, %cst_75 [0] : vector<8x128xf32> to vector<128xf32>
    %171 = vector.shape_cast %170 : vector<128xf32> to vector<1x128xf32>
    %cst_76 = arith.constant 8.000000e+00 : f32
    %172 = vector.broadcast %cst_76 : f32 to vector<1x128xf32>
    %173 = arith.divf %171, %172 : vector<1x128xf32>
    %cst_77 = arith.constant 9.99999974E-6 : f32
    %174 = vector.broadcast %cst_77 : f32 to vector<1x128xf32>
    %175 = arith.addf %173, %174 : vector<1x128xf32>
    %176 = math.rsqrt %175 : vector<1x128xf32>
    %177 = vector.broadcast %176 : vector<1x128xf32> to vector<8x128xf32>
    %178 = arith.mulf %168, %177 : vector<8x128xf32>
    %179 = vector.extract_strided_slice %2 {offsets = [3, 0, 0], sizes = [1, 1, 128], strides = [1, 1, 1]} : vector<4x2x128xf32> to vector<1x1x128xf32>
    %180 = vector.shape_cast %179 : vector<1x1x128xf32> to vector<1x128xf32>
    %181 = vector.broadcast %180 : vector<1x128xf32> to vector<8x128xf32>
    %182 = arith.mulf %178, %181 : vector<8x128xf32>
    %183 = vector.extract_strided_slice %2 {offsets = [3, 1, 0], sizes = [1, 1, 128], strides = [1, 1, 1]} : vector<4x2x128xf32> to vector<1x1x128xf32>
    %184 = vector.shape_cast %183 : vector<1x1x128xf32> to vector<1x128xf32>
    %185 = vector.broadcast %184 : vector<1x128xf32> to vector<8x128xf32>
    %186 = arith.addf %182, %185 : vector<8x128xf32>
    %cst_78 = arith.constant 0.000000e+00 : f32
    %187 = vector.broadcast %cst_78 : f32 to vector<8x128xf32>
    %188 = arith.cmpf oge, %186, %187 : vector<8x128xf32>
    %cst_79 = arith.constant 0.00999999977 : f32
    %189 = vector.broadcast %cst_79 : f32 to vector<8x128xf32>
    %190 = arith.mulf %189, %186 : vector<8x128xf32>
    %191 = arith.select %188, %186, %190 : vector<8x128xi1>, vector<8x128xf32>
    %192 = arith.mulf %191, %191 : vector<8x128xf32>
    %cst_80 = arith.constant dense<0.000000e+00> : vector<8xf32>
    %193 = vector.multi_reduction <add>, %192, %cst_80 [1] : vector<8x128xf32> to vector<8xf32>
    %194 = vector.shape_cast %193 : vector<8xf32> to vector<8x1xf32>
    %195 = math.rsqrt %194 : vector<8x1xf32>
    %196 = vector.broadcast %195 : vector<8x1xf32> to vector<8x128xf32>
    %197 = arith.mulf %191, %196 : vector<8x128xf32>
    %c3_81 = arith.constant 3 : index
    %c0_82 = arith.constant 0 : index
    %c0_83 = arith.constant 0 : index
    %198 = vector.load %arg6[%c3_81, %c0_82, %c0_83] : memref<4x8x128xf32, #tpu.memory_space<vmem>>, vector<1x8x128xf32>
    %199 = vector.shape_cast %198 : vector<1x8x128xf32> to vector<8x128xf32>
    %200 = vector.shape_cast %197 : vector<8x128xf32> to vector<1x8x128xf32>
    tpu.vector_store %arg6[%c3_81, %c0_82, %c0_83], %200 {strides = array<i32>} : memref<4x8x128xf32, #tpu.memory_space<vmem>>, vector<1x8x128xf32>,
    %201 = arith.truncf %197 : vector<8x128xf32> to vector<8x128xbf16>
    %c3_84 = arith.constant 3 : index
    %c0_85 = arith.constant 0 : index
    %c0_86 = arith.constant 0 : index
    %202 = vector.load %arg4[%c3_84, %c0_85, %c0_86] : memref<4x128x128xbf16, #tpu.memory_space<vmem>>, vector<1x128x128xbf16>
    %203 = vector.shape_cast %202 : vector<1x128x128xbf16> to vector<128x128xbf16>
    %cst_87 = arith.constant dense<0.000000e+00> : vector<8x128xf32>
    %204 = tpu.matmul %201, %203, %cst_87 {dimension_numbers = #tpu.dot_dimension_numbers<[1], [0], [0], [1], [0, 0, 1, 1], [], []>} : vector<8x128xbf16>, vector<128x128xbf16>, vector<8x128xf32> -> vector<8x128xf32>
    %205 = vector.extract_strided_slice %3 {offsets = [3, 0, 0], sizes = [1, 1, 128], strides = [1, 1, 1]} : vector<4x1x128xf32> to vector<1x1x128xf32>
    %206 = vector.shape_cast %205 : vector<1x1x128xf32> to vector<1x128xf32>
    %207 = vector.broadcast %206 : vector<1x128xf32> to vector<8x128xf32>
    %208 = arith.addf %204, %207 : vector<8x128xf32>
    %c3_88 = arith.constant 3 : index
    %c0_89 = arith.constant 0 : index
    %c0_90 = arith.constant 0 : index
    %209 = vector.load %arg7[%c3_88, %c0_89, %c0_90] : memref<4x8x128xf32, #tpu.memory_space<vmem>>, vector<1x8x128xf32>
    %210 = vector.shape_cast %209 : vector<1x8x128xf32> to vector<8x128xf32>
    %211 = vector.shape_cast %208 : vector<8x128xf32> to vector<1x8x128xf32>
    tpu.vector_store %arg7[%c3_88, %c0_89, %c0_90], %211 {strides = array<i32>} : memref<4x8x128xf32, #tpu.memory_space<vmem>>, vector<1x8x128xf32>,
    return
  }
  func.func @transform_0(%arg0: i32) -> (i32, i32) {
    %c0_i32 = arith.constant 0 : i32
    %c0_i32_0 = arith.constant 0 : i32
    %c0_i32_1 = arith.constant 0 : i32
    return %c0_i32, %c0_i32_0 : i32, i32
  }
  func.func @transform_1(%arg0: i32) -> (i32, i32, i32) {
    %c0_i32 = arith.constant 0 : i32
    %c0_i32_0 = arith.constant 0 : i32
    %c0_i32_1 = arith.constant 0 : i32
    return %arg0, %c0_i32, %c0_i32_0 : i32, i32, i32
  }
  func.func @transform_2(%arg0: i32) -> (i32, i32, i32) {
    %c0_i32 = arith.constant 0 : i32
    %c0_i32_0 = arith.constant 0 : i32
    %c0_i32_1 = arith.constant 0 : i32
    return %arg0, %c0_i32, %c0_i32_0 : i32, i32, i32
  }
  func.func @transform_3(%arg0: i32) -> (i32, i32, i32) {
    %c0_i32 = arith.constant 0 : i32
    %c0_i32_0 = arith.constant 0 : i32
    %c0_i32_1 = arith.constant 0 : i32
    return %arg0, %c0_i32, %c0_i32_0 : i32, i32, i32
  }
  func.func @transform_4(%arg0: i32) -> (i32, i32, i32) {
    %c0_i32 = arith.constant 0 : i32
    %c0_i32_0 = arith.constant 0 : i32
    %c0_i32_1 = arith.constant 0 : i32
    return %arg0, %c0_i32, %c0_i32_0 : i32, i32, i32
  }
  func.func @transform_5(%arg0: i32) -> (i32, i32, i32) {
    %c0_i32 = arith.constant 0 : i32
    %c0_i32_0 = arith.constant 0 : i32
    %c0_i32_1 = arith.constant 0 : i32
    return %arg0, %c0_i32, %c0_i32_0 : i32, i32, i32
  }
  func.func @transform_6(%arg0: i32) -> (i32, i32, i32) {
    %c0_i32 = arith.constant 0 : i32
    %c0_i32_0 = arith.constant 0 : i32
    %c0_i32_1 = arith.constant 0 : i32
    return %arg0, %c0_i32, %c0_i32_0 : i32, i32, i32
  }
}

</mosaic_0001>

<llo_original>
// kernel: tpu_custom_call.1
$region0: #{tpu_custom_call.1}
  #allocation0 [shape = 'u32[]', space=smem, size = 0x4, offset = 0x4, fixed_abs, tag = 'smem constant byte address 0x4 - core index']
  #allocation1 [shape = 'u32[144,128]{1,0:T(1,128)}', space=vmem, size = 0x12000, scoped, tag = 'internal scratch']
  %s0 = inlined_call_operand.hbm [shape: f32[8,128], index: 0, kind: input, shape index: {}]
  %s1 = inlined_call_operand.hbm [shape: bf16[8,128,128], index: 1, kind: input, shape index: {}]
  %s2 = inlined_call_operand.hbm [shape: f32[8,2,128], index: 2, kind: input, shape index: {}]
  %s3 = inlined_call_operand.hbm [shape: bf16[8,128,128], index: 3, kind: input, shape index: {}]
  %s4 = inlined_call_operand.vmem [shape: f32[8,1,128], index: 4, kind: input, shape index: {}]
  %s5 = inlined_call_operand.hbm [shape: f32[8,8,128], index: 5, kind: output, shape index: {0}]
  %s6 = inlined_call_operand.hbm [shape: f32[8,8,128], index: 6, kind: output, shape index: {1}]
  %7 = xla_tuple %s5, %s6
  %s8 = sld [smem:[#allocation0]]
  $region77: #{tpu_custom_call.1} parent=0
    _
  %s10 = ssub.s32 1, %s8
  %s11 = scalar_select 0, %s10, %s8
  $region1: #{tpu_custom_call.1} parent=0
    #allocation2 [shape = 'u8[4096]{0}', space=vmem, size = 0x1000, scoped, tag = 'input window, operand 0, single buffered']
    #allocation3 [shape = 's32[2]{0}', space=sflag, size = 0x8, scoped, tag = 'scoped memory for tpu_custom_call.1']
    #allocation4 [shape = 's32[2]{0}', space=sflag, size = 0x8, scoped, tag = 'scoped memory for tpu_custom_call.1']
    #allocation5 [shape = 'u8[262144]{0}', space=vmem, size = 0x40000, scoped, tag = 'input window, operand 1']
    #allocation6 [shape = 's32[2]{0}', space=sflag, size = 0x8, scoped, tag = 'scoped memory for tpu_custom_call.1']
    #allocation7 [shape = 'u8[8192]{0}', space=vmem, size = 0x2000, scoped, tag = 'input window, operand 2']
    #allocation8 [shape = 'u8[262144]{0}', space=vmem, size = 0x40000, scoped, tag = 'input window, operand 3']
    #allocation9 [shape = 's32[2]{0}', space=sflag, size = 0x8, scoped, tag = 'scoped memory for tpu_custom_call.1']
    #allocation10 [shape = 'u8[32768]{0}', space=vmem, size = 0x8000, scoped, tag = 'output window, operand 0']
    #allocation11 [shape = 'u8[32768]{0}', space=vmem, size = 0x8000, scoped, tag = 'output window, operand 1']
    #allocation12 [shape = 's32[2]{0}', space=sflag, size = 0x8, scoped, tag = 'scoped memory for tpu_custom_call.1']
    %12 = vsyncpa [#allocation3], 0
    %13 = vsyncpa [#allocation6], 0
    %s14 = scalar_lea.sflag [#allocation6], 1
    %15 = vsyncpa %s14, 0
    %16 = vsyncpa [#allocation9], 0
    %s17 = scalar_lea.sflag [#allocation9], 1
    %18 = vsyncpa %s17, 0
    %19 = vsyncpa [#allocation4], 0
    %s20 = scalar_lea.sflag [#allocation4], 1
    %21 = vsyncpa %s20, 0
    %22 = vsyncpa [#allocation12], 0
    %s23 = scalar_lea.sflag [#allocation12], 1
    %24 = vsyncpa %s23, 0
    loop: start=0, step=1, limit=4
    $region2: #{tpu_custom_call.1} parent=1 // loop_pre_header
      _
    $region3: #{tpu_custom_call.1} parent=1 // loop_header
      %s26 = sphi 0, %s30
      %p27 = scmp.ge.s32.totalorder %s26, 4
      %s34 = sphi 0, %s34
      %s36 = sphi 0, %s34
      %s37 = sphi 0, %s36
      %s51 = sphi 0, %s37
      %s57 = sphi 0, %s59
      %s60 = sphi 0, %s57
      %s61 = sphi 0, %s60
      %s77 = sphi 0, %s61
      %s83 = sphi 0, %s85
      %s86 = sphi 0, %s83
      %s87 = sphi 0, %s86
      %s103 = sphi 0, %s87
      %s109 = sphi 0, %s111
      %s112 = sphi 0, %s109
      %s113 = sphi 0, %s112
      %s129 = sphi 0, %s113
      %s135 = sphi 0, %s137
      %s138 = sphi 0, %s135
      %s139 = sphi 0, %s138
      %s155 = sphi 0, %s139
      %s161 = sphi 0, %s163
      %s164 = sphi 0, %s161
      %s165 = sphi 0, %s164
      %s181 = sphi 0, %s165
      %s187 = sphi 0, %s189
      %s190 = sphi 0, %s187
      %s191 = sphi 0, %s190
      %s207 = sphi 0, %s191
    $region4: #{tpu_custom_call.1} parent=1 // loop_header_branch
      %29 = sbr.rel (%p27) target = $region8
    $region5: #{tpu_custom_call.1} parent=1 // loop_body
      %s31 = ssub.s32 %s26, 1
      %s32 = ssub.s32 %s26, 2
      %s33 = sadd.s32 %s26, 1
      %s35 = sadd.s32 %s34, 1
      %p38 = scmp.eq.s32.totalorder %s26, 1
      %p39 = scmp.ne.s32.totalorder %s34, %s36
      %p40 = scmp.eq.s32.totalorder %s26, 0
      %p41 = por %p39, %p40
      %p42 = scmp.ne.s32.totalorder %s34, %s36
      %p43 = scmp.eq.s32.totalorder %s31, 1
      %p44 = por %p42, %p43
      %p45 = scmp.ne.s32.totalorder %s36, %s37
      %p46 = scmp.eq.s32.totalorder %s31, 0
      %p47 = por %p45, %p46
      %p48 = scmp.ne.s32.totalorder %s36, %s37
      %p49 = scmp.eq.s32.totalorder %s32, 1
      %p50 = por %p48, %p49
      %p52 = scmp.ne.s32.totalorder %s37, %s51
      %p53 = scmp.eq.s32.totalorder %s32, 0
      %p54 = por %p52, %p53
      %s55 = ssub.s32 %s26, %s33
      %p56 = scmp.eq.s32.totalorder %s55, 0
      %s58 = sadd.s32 %s57, 1
      %s59 = scalar_select %p56, %s57, %s58
      %p62 = pneg %p56
      %p63 = scmp.eq.s32.totalorder %s26, 1
      %p64 = por %p62, %p63
      %p65 = scmp.ne.s32.totalorder %s57, %s60
      %p66 = scmp.eq.s32.totalorder %s26, 0
      %p67 = por %p65, %p66
      %p68 = scmp.ne.s32.totalorder %s57, %s60
      %p69 = scmp.eq.s32.totalorder %s31, 1
      %p70 = por %p68, %p69
      %p71 = scmp.ne.s32.totalorder %s60, %s61
      %p72 = scmp.eq.s32.totalorder %s31, 0
      %p73 = por %p71, %p72
      %p74 = scmp.ne.s32.totalorder %s60, %s61
      %p75 = scmp.eq.s32.totalorder %s32, 1
      %p76 = por %p74, %p75
      %p78 = scmp.ne.s32.totalorder %s61, %s77
      %p79 = scmp.eq.s32.totalorder %s32, 0
      %p80 = por %p78, %p79
      %s81 = ssub.s32 %s26, %s33
      %p82 = scmp.eq.s32.totalorder %s81, 0
      %s84 = sadd.s32 %s83, 1
      %s85 = scalar_select %p82, %s83, %s84
      %p88 = pneg %p82
      %p89 = scmp.eq.s32.totalorder %s26, 1
      %p90 = por %p88, %p89
      %p91 = scmp.ne.s32.totalorder %s83, %s86
      %p92 = scmp.eq.s32.totalorder %s26, 0
      %p93 = por %p91, %p92
      %p94 = scmp.ne.s32.totalorder %s83, %s86
      %p95 = scmp.eq.s32.totalorder %s31, 1
      %p96 = por %p94, %p95
      %p97 = scmp.ne.s32.totalorder %s86, %s87
      %p98 = scmp.eq.s32.totalorder %s31, 0
      %p99 = por %p97, %p98
      %p100 = scmp.ne.s32.totalorder %s86, %s87
      %p101 = scmp.eq.s32.totalorder %s32, 1
      %p102 = por %p100, %p101
      %p104 = scmp.ne.s32.totalorder %s87, %s103
      %p105 = scmp.eq.s32.totalorder %s32, 0
      %p106 = por %p104, %p105
      %s107 = ssub.s32 %s26, %s33
      %p108 = scmp.eq.s32.totalorder %s107, 0
      %s110 = sadd.s32 %s109, 1
      %s111 = scalar_select %p108, %s109, %s110
      %p114 = pneg %p108
      %p115 = scmp.eq.s32.totalorder %s26, 1
      %p116 = por %p114, %p115
      %p117 = scmp.ne.s32.totalorder %s109, %s112
      %p118 = scmp.eq.s32.totalorder %s26, 0
      %p119 = por %p117, %p118
      %p120 = scmp.ne.s32.totalorder %s109, %s112
      %p121 = scmp.eq.s32.totalorder %s31, 1
      %p122 = por %p120, %p121
      %p123 = scmp.ne.s32.totalorder %s112, %s113
      %p124 = scmp.eq.s32.totalorder %s31, 0
      %p125 = por %p123, %p124
      %p126 = scmp.ne.s32.totalorder %s112, %s113
      %p127 = scmp.eq.s32.totalorder %s32, 1
      %p128 = por %p126, %p127
      %p130 = scmp.ne.s32.totalorder %s113, %s129
      %p131 = scmp.eq.s32.totalorder %s32, 0
      %p132 = por %p130, %p131
      %s133 = ssub.s32 %s26, %s33
      %p134 = scmp.eq.s32.totalorder %s133, 0
      %s136 = sadd.s32 %s135, 1
      %s137 = scalar_select %p134, %s135, %s136
      %p140 = pneg %p134
      %p141 = scmp.eq.s32.totalorder %s26, 1
      %p142 = por %p140, %p141
      %p143 = scmp.ne.s32.totalorder %s135, %s138
      %p144 = scmp.eq.s32.totalorder %s26, 0
      %p145 = por %p143, %p144
      %p146 = scmp.ne.s32.totalorder %s135, %s138
      %p147 = scmp.eq.s32.totalorder %s31, 1
      %p148 = por %p146, %p147
      %p149 = scmp.ne.s32.totalorder %s138, %s139
      %p150 = scmp.eq.s32.totalorder %s31, 0
      %p151 = por %p149, %p150
      %p152 = scmp.ne.s32.totalorder %s138, %s139
      %p153 = scmp.eq.s32.totalorder %s32, 1
      %p154 = por %p152, %p153
      %p156 = scmp.ne.s32.totalorder %s139, %s155
      %p157 = scmp.eq.s32.totalorder %s32, 0
      %p158 = por %p156, %p157
      %s159 = ssub.s32 %s26, %s33
      %p160 = scmp.eq.s32.totalorder %s159, 0
      %s162 = sadd.s32 %s161, 1
      %s163 = scalar_select %p160, %s161, %s162
      %p166 = pneg %p160
      %p167 = scmp.eq.s32.totalorder %s26, 1
      %p168 = por %p166, %p167
      %p169 = scmp.ne.s32.totalorder %s161, %s164
      %p170 = scmp.eq.s32.totalorder %s26, 0
      %p171 = por %p169, %p170
      %p172 = scmp.ne.s32.totalorder %s161, %s164
      %p173 = scmp.eq.s32.totalorder %s31, 1
      %p174 = por %p172, %p173
      %p175 = scmp.ne.s32.totalorder %s164, %s165
      %p176 = scmp.eq.s32.totalorder %s31, 0
      %p177 = por %p175, %p176
      %p178 = scmp.ne.s32.totalorder %s164, %s165
      %p179 = scmp.eq.s32.totalorder %s32, 1
      %p180 = por %p178, %p179
      %p182 = scmp.ne.s32.totalorder %s165, %s181
      %p183 = scmp.eq.s32.totalorder %s32, 0
      %p184 = por %p182, %p183
      %s185 = ssub.s32 %s26, %s33
      %p186 = scmp.eq.s32.totalorder %s185, 0
      %s188 = sadd.s32 %s187, 1
      %s189 = scalar_select %p186, %s187, %s188
      %p192 = pneg %p186
      %p193 = scmp.eq.s32.totalorder %s26, 1
      %p194 = por %p192, %p193
      %p195 = scmp.ne.s32.totalorder %s187, %s190
      %p196 = scmp.eq.s32.totalorder %s26, 0
      %p197 = por %p195, %p196
      %p198 = scmp.ne.s32.totalorder %s187, %s190
      %p199 = scmp.eq.s32.totalorder %s31, 1
      %p200 = por %p198, %p199
      %p201 = scmp.ne.s32.totalorder %s190, %s191
      %p202 = scmp.eq.s32.totalorder %s31, 0
      %p203 = por %p201, %p202
      %p204 = scmp.ne.s32.totalorder %s190, %s191
      %p205 = scmp.eq.s32.totalorder %s32, 1
      %p206 = por %p204, %p205
      %p208 = scmp.ne.s32.totalorder %s191, %s207
      %p209 = scmp.eq.s32.totalorder %s32, 0
      %p210 = por %p208, %p209
      %p211 = scmp.le.s32.totalorder 1, %s26
      %p212 = scmp.lt.s32.totalorder %s26, 3
      %p213 = pnand %p211, %p212
      %p214 = pneg %p213
      // Predicated region
      $region9: #{tpu_custom_call.1} parent=5 // pred_check
        _
      $region10: #{tpu_custom_call.1} parent=5 // pred_check_branch
        %216 = sbr.rel (%p213) target = $region12
      $region11: #{tpu_custom_call.1} parent=5 // pred_region
        %s217 = ssub.s32 %s26, 1
        // Predicated region
        $region13: #{tpu_custom_call.1} parent=11 // pred_check
          %p218 = pneg %p47
        $region14: #{tpu_custom_call.1} parent=11 // pred_check_branch
          %220 = sbr.rel (%p218) target = $region16
        $region15: #{tpu_custom_call.1} parent=11 // pred_region
          %s222 = ssub.s32 128, 128
          %223 = vsyncadd [#allocation3], %s222
          %s225 = sshll.u32 [#allocation2], 4
          %s226 = int_to_ptr.vmem [resolvable:$true] %s225
          %228 = dma.hbm_to_vmem [thread:$0]  %s0, 128, %s226, [#allocation3]
        $region16: #{tpu_custom_call.1} parent=11 // pred_fallthru
          _
      $region12: #{tpu_custom_call.1} parent=5 // pred_fallthru
        _
      %p229 = scmp.lt.s32.totalorder %s26, 2
      // Predicated region
      $region17: #{tpu_custom_call.1} parent=5 // pred_check
        %p230 = pneg %p229
      $region18: #{tpu_custom_call.1} parent=5 // pred_check_branch
        %232 = sbr.rel (%p230) target = $region20
      $region19: #{tpu_custom_call.1} parent=5 // pred_region
        // Predicated region
        $region21: #{tpu_custom_call.1} parent=19 // pred_check
          %p233 = pneg %p67
        $region22: #{tpu_custom_call.1} parent=19 // pred_check_branch
          %235 = sbr.rel (%p233) target = $region24
        $region23: #{tpu_custom_call.1} parent=19 // pred_region
          %s236 = sand.u32 %s26, 1
          %s237 = scalar_lea.sflag [#allocation6], %s236
          %s238 = sand.u32 %s57, 1
          %s239 = smul.addr %s238, 256
          %s240 = scalar_lea.vmem [#allocation5], %s239
          %s241 = smul.u32 4, %s26
          %s243 = ssub.s32 4096, 4096
          %244 = vsyncadd %s237, %s243
          %s245 = smul.addr %s241, 16
          %s246 = smul.addr %s245, 64
          %s247 = scalar_lea.hbm %s1, %s246
          %s248 = sshll.u32 %s240, 4
          %s249 = int_to_ptr.vmem [resolvable:$true] %s248
          %254 = dma.hbm_to_vmem [thread:$0]  %s247, 4096, %s249, %s237, 64, 64, 4
        $region24: #{tpu_custom_call.1} parent=19 // pred_fallthru
          _
        // Predicated region
        $region25: #{tpu_custom_call.1} parent=19 // pred_check
          %p255 = pneg %p93
        $region26: #{tpu_custom_call.1} parent=19 // pred_check_branch
          %257 = sbr.rel (%p255) target = $region28
        $region27: #{tpu_custom_call.1} parent=19 // pred_region
          %s258 = sand.u32 %s26, 1
          %s259 = scalar_lea.sflag [#allocation6], %s258
          %s260 = sand.u32 %s83, 1
          %s261 = smul.addr %s260, 8
          %s262 = scalar_lea.vmem [#allocation7], %s261
          %s263 = smul.u32 4, %s26
          %s265 = ssub.s32 128, 128
          %266 = vsyncadd %s259, %s265
          %s267 = smul.addr %s263, 32
          %s268 = scalar_lea.hbm %s2, %s267
          %s269 = sshll.u32 %s262, 4
          %s270 = int_to_ptr.vmem [resolvable:$true] %s269
          %275 = dma.hbm_to_vmem [thread:$0]  %s268, 128, %s270, %s259, 32, 32, 2
        $region28: #{tpu_custom_call.1} parent=19 // pred_fallthru
          _
        // Predicated region
        $region29: #{tpu_custom_call.1} parent=19 // pred_check
          %p276 = pneg %p119
        $region30: #{tpu_custom_call.1} parent=19 // pred_check_branch
          %278 = sbr.rel (%p276) target = $region32
        $region31: #{tpu_custom_call.1} parent=19 // pred_region
          %s279 = sand.u32 %s109, 1
          %s280 = scalar_lea.sflag [#allocation9], %s279
          %s281 = sand.u32 %s109, 1
          %s282 = smul.addr %s281, 256
          %s283 = scalar_lea.vmem [#allocation8], %s282
          %s284 = smul.u32 4, %s26
          %s286 = ssub.s32 4096, 4096
          %287 = vsyncadd %s280, %s286
          %s288 = smul.addr %s284, 16
          %s289 = smul.addr %s288, 64
          %s290 = scalar_lea.hbm %s3, %s289
          %s291 = sshll.u32 %s283, 4
          %s292 = int_to_ptr.vmem [resolvable:$true] %s291
          %297 = dma.hbm_to_vmem [thread:$0]  %s290, 4096, %s292, %s280, 64, 64, 4
        $region32: #{tpu_custom_call.1} parent=19 // pred_fallthru
          _
        // Predicated region
        $region33: #{tpu_custom_call.1} parent=19 // pred_check
          %p298 = pneg %p145
        $region34: #{tpu_custom_call.1} parent=19 // pred_check_branch
          %300 = sbr.rel (%p298) target = $region36
        $region35: #{tpu_custom_call.1} parent=19 // pred_region
          %s301 = smul.u32 4, %s26
          %p302 = scmp.lt.s32.totalorder %s301, 7
          %s303 = scalar_select %p302, %s301, 7
          %s304 = scalar_lea.vmem %s4, %s303
          %s305 = smul.u32 4, %s26
        $region36: #{tpu_custom_call.1} parent=19 // pred_fallthru
          _
      $region20: #{tpu_custom_call.1} parent=5 // pred_fallthru
        _
      %p306 = scmp.le.s32.totalorder 1, %s26
      %p307 = scmp.lt.s32.totalorder %s26, 3
      %p308 = pnand %p306, %p307
      %p309 = pneg %p308
      // Predicated region
      $region37: #{tpu_custom_call.1} parent=5 // pred_check
        _
      $region38: #{tpu_custom_call.1} parent=5 // pred_check_branch
        %311 = sbr.rel (%p308) target = $region40
      $region39: #{tpu_custom_call.1} parent=5 // pred_region
        %s312 = ssub.s32 %s26, 1
        // Predicated region
        $region41: #{tpu_custom_call.1} parent=39 // pred_check
          %p313 = pneg %p47
        $region42: #{tpu_custom_call.1} parent=39 // pred_check_branch
          %315 = sbr.rel (%p313) target = $region44
        $region43: #{tpu_custom_call.1} parent=39 // pred_region
          %316 = dma.done [#allocation3], 128
        $region44: #{tpu_custom_call.1} parent=39 // pred_fallthru
          _
        %s317 = sand.u32 %s31, 1
        %s318 = scalar_lea.sflag [#allocation6], %s317
        %s319 = sand.u32 %s60, 1
        %s320 = smul.addr %s319, 256
        %s321 = scalar_lea.vmem [#allocation5], %s320
        // Predicated region
        $region45: #{tpu_custom_call.1} parent=39 // pred_check
          %p322 = pneg %p73
        $region46: #{tpu_custom_call.1} parent=39 // pred_check_branch
          %324 = sbr.rel (%p322) target = $region48
        $region47: #{tpu_custom_call.1} parent=39 // pred_region
          %325 = dma.done %s318, 4096
        $region48: #{tpu_custom_call.1} parent=39 // pred_fallthru
          _
        %s326 = sand.u32 %s31, 1
        %s327 = scalar_lea.sflag [#allocation6], %s326
        %s328 = sand.u32 %s86, 1
        %s329 = smul.addr %s328, 8
        %s330 = scalar_lea.vmem [#allocation7], %s329
        // Predicated region
        $region49: #{tpu_custom_call.1} parent=39 // pred_check
          %p331 = pneg %p99
        $region50: #{tpu_custom_call.1} parent=39 // pred_check_branch
          %333 = sbr.rel (%p331) target = $region52
        $region51: #{tpu_custom_call.1} parent=39 // pred_region
          %334 = dma.done %s327, 128
        $region52: #{tpu_custom_call.1} parent=39 // pred_fallthru
          _
        %s335 = sand.u32 %s112, 1
        %s336 = scalar_lea.sflag [#allocation9], %s335
        %s337 = sand.u32 %s112, 1
        %s338 = smul.addr %s337, 256
        %s339 = scalar_lea.vmem [#allocation8], %s338
        // Predicated region
        $region53: #{tpu_custom_call.1} parent=39 // pred_check
          %p340 = pneg %p125
        $region54: #{tpu_custom_call.1} parent=39 // pred_check_branch
          %342 = sbr.rel (%p340) target = $region56
        $region55: #{tpu_custom_call.1} parent=39 // pred_region
          %343 = dma.done %s336, 4096
        $region56: #{tpu_custom_call.1} parent=39 // pred_fallthru
          _
        %p344 = pneg %p47
        %p345 = pneg %p44
        %s346 = sand.u32 %s31, 1
        %s347 = scalar_lea.sflag [#allocation6], %s346
        %s348 = sand.u32 %s60, 1
        %s349 = smul.addr %s348, 256
        %s350 = scalar_lea.vmem [#allocation5], %s349
        %p351 = pneg %p73
        %p352 = pneg %p70
        %s353 = sand.u32 %s31, 1
        %s354 = scalar_lea.sflag [#allocation6], %s353
        %s355 = sand.u32 %s86, 1
        %s356 = smul.addr %s355, 8
        %s357 = scalar_lea.vmem [#allocation7], %s356
        %p358 = pneg %p99
        %p359 = pneg %p96
        %s360 = sand.u32 %s112, 1
        %s361 = scalar_lea.sflag [#allocation9], %s360
        %s362 = sand.u32 %s112, 1
        %s363 = smul.addr %s362, 256
        %s364 = scalar_lea.vmem [#allocation8], %s363
        %p365 = pneg %p125
        %p366 = pneg %p122
        %s367 = smul.u32 4, %s31
        %p368 = scmp.lt.s32.totalorder %s367, 7
        %s369 = scalar_select %p368, %s367, 7
        %s370 = scalar_lea.vmem %s4, %s369
        %p371 = pneg %p151
        %p372 = pneg %p148
        %p373 = pneg %p177
        %p374 = pneg %p174
        %s375 = sand.u32 %s164, 1
        %s376 = scalar_lea.sflag [#allocation4], %s375
        %s377 = sand.u32 %s164, 1
        %s378 = smul.addr %s377, 32
        %s379 = scalar_lea.vmem [#allocation10], %s378
        %p380 = pneg %p203
        %p381 = pneg %p200
        %s382 = sand.u32 %s190, 1
        %s383 = scalar_lea.sflag [#allocation12], %s382
        %s384 = sand.u32 %s190, 1
        %s385 = smul.addr %s384, 32
        %s386 = scalar_lea.vmem [#allocation11], %s385
        %s387 = smul.u32 4, %s31
        %s388 = smul.u32 4, %s31
        %s389 = smul.u32 4, %s31
        %s390 = smul.u32 4, %s31
        %p391 = scmp.lt.s32.totalorder %s390, 7
        %s392 = scalar_select %p391, %s390, 7
        %s393 = scalar_lea.vmem %s4, %s392
        %s394 = smul.u32 4, %s31
        %s395 = smul.u32 4, %s31
        %s396 = smul.u32 4, %s31
        %v398 = vld [vmem:[#allocation2] sm:$0xff]
        %v399 = vpack.c.bf16 %v398, %v398
        %v400 = vld [vmem:[%s330] sm:$0x3]
        %v401 = vld [vmem:[%s330 + $0x2] sm:$0x3]
        %v402 = vld [vmem:[%s330 + $0x4] sm:$0x3]
        %v403 = vld [vmem:[%s330 + $0x6] sm:$0x3]
        %v404 = vld [vmem:[%s393] sm:$0x1]
        %v405 = vld [vmem:[%s393 + $0x1] sm:$0x1]
        %v406 = vld [vmem:[%s393 + $0x2] sm:$0x1]
        %v407 = vld [vmem:[%s393 + $0x3] sm:$0x1]
        %v408 = vld [vmem:[%s321] sm:$0xf]
        %v409 = vld [vmem:[%s321 + $0x4] sm:$0xf]
        %v410 = vld [vmem:[%s321 + $0x8] sm:$0xf]
        %v411 = vld [vmem:[%s321 + $0xc] sm:$0xf]
        %v412 = vld [vmem:[%s321 + $0x10] sm:$0xf]
        %v413 = vld [vmem:[%s321 + $0x14] sm:$0xf]
        %v414 = vld [vmem:[%s321 + $0x18] sm:$0xf]
        %v415 = vld [vmem:[%s321 + $0x1c] sm:$0xf]
        %v416 = vld [vmem:[%s321 + $0x20] sm:$0xf]
        %v417 = vld [vmem:[%s321 + $0x24] sm:$0xf]
        %v418 = vld [vmem:[%s321 + $0x28] sm:$0xf]
        %v419 = vld [vmem:[%s321 + $0x2c] sm:$0xf]
        %v420 = vld [vmem:[%s321 + $0x30] sm:$0xf]
        %v421 = vld [vmem:[%s321 + $0x34] sm:$0xf]
        %v422 = vld [vmem:[%s321 + $0x38] sm:$0xf]
        %v423 = vld [vmem:[%s321 + $0x3c] sm:$0xf]
        %v440 = vunpack.c.l.b16 %v408
        %v441 = vunpack.c.l.b16 %v409
        %v442 = vunpack.c.l.b16 %v410
        %v443 = vunpack.c.l.b16 %v411
        %v444 = vunpack.c.l.b16 %v412
        %v445 = vunpack.c.l.b16 %v413
        %v446 = vunpack.c.l.b16 %v414
        %v447 = vunpack.c.l.b16 %v415
        %v448 = vunpack.c.l.b16 %v416
        %v449 = vunpack.c.l.b16 %v417
        %v450 = vunpack.c.l.b16 %v418
        %v451 = vunpack.c.l.b16 %v419
        %v452 = vunpack.c.l.b16 %v420
        %v453 = vunpack.c.l.b16 %v421
        %v454 = vunpack.c.l.b16 %v422
        %v455 = vunpack.c.l.b16 %v423
        %v456 = vpack.c.b16 %v441, %v440
        %v457 = vpack.c.b16 %v443, %v442
        %v458 = vpack.c.b16 %v445, %v444
        %v459 = vpack.c.b16 %v447, %v446
        %v460 = vpack.c.b16 %v449, %v448
        %v461 = vpack.c.b16 %v451, %v450
        %v462 = vpack.c.b16 %v453, %v452
        %v463 = vpack.c.b16 %v455, %v454
        %472 = vmatprep.subr.bf16.mxu0 0
        %473 = vmatpush1.bf16.msra.mxu0 %v456
        %474 = vmatprep.subr.bf16.mxu0 0
        %475 = vmatpush1.bf16.msra.mxu0 %v457
        %476 = vmatprep.subr.bf16.mxu0 0
        %477 = vmatpush1.bf16.msra.mxu0 %v458
        %478 = vmatprep.subr.bf16.mxu0 0
        %479 = vmatpush1.bf16.msra.mxu0 %v459
        %480 = vmatprep.subr.bf16.mxu0 0
        %481 = vmatpush1.bf16.msra.mxu0 %v460
        %482 = vmatprep.subr.bf16.mxu0 0
        %483 = vmatpush1.bf16.msra.mxu0 %v461
        %484 = vmatprep.subr.bf16.mxu0 0
        %485 = vmatpush1.bf16.msra.mxu0 %v462
        %486 = vmatprep.subr.bf16.mxu0 0
        %487 = vmatpush1.bf16.msra.mxu0 %v463
        %488 = vmatprep.subr.bf16.mxu0 0
        %489 = vmatpush1.bf16.msra.mxu0 0
        %490 = vmatprep.subr.bf16.mxu0 0
        %491 = vmatpush1.bf16.msra.mxu0 0
        %492 = vmatprep.subr.bf16.mxu0 0
        %493 = vmatpush1.bf16.msra.mxu0 0
        %494 = vmatprep.subr.bf16.mxu0 0
        %495 = vmatpush1.bf16.msra.mxu0 0
        %496 = vmatprep.subr.bf16.mxu0 0
        %497 = vmatpush1.bf16.msra.mxu0 0
        %498 = vmatprep.subr.bf16.mxu0 0
        %499 = vmatpush1.bf16.msra.mxu0 0
        %500 = vmatprep.subr.bf16.mxu0 0
        %501 = vmatpush1.bf16.msra.mxu0 0
        %502 = vmatprep.subr.bf16.mxu0 0
        %503 = vmatpush1.bf16.msra.mxu0 0
        %504 = vmatprep.mubr.bf16.mxu0 0
        %505 = vmatmul.mubr.bf16.gmra.mrb[0].mxu0 %v399
        %v506 = vpop.f32.mrb[0].mxu0
        %v507 = vadd.f32 0.0, %v506
        %v508 = vpop.f32.mrb[0].mxu0
        %v509 = vpop.f32.mrb[0].mxu0
        %v510 = vpop.f32.mrb[0].mxu0
        %511 = vdwg.mxu0
        %v512 = vrot.slane %v507, 4
        %v513 = vadd.f32 %v507, %v512
        %v514 = vrot.slane %v513, 2
        %v515 = vadd.f32 %v513, %v514
        %v516 = vrot.slane %v515, 1
        %v517 = vadd.f32 %v515, %v516
        %v518 = vrcp.pop 8.0
        %v519 = vmul.f32 %v517, %v518
        %v520 = vsub.f32 %v507, %v519
        %v521 = vmul.f32 %v520, %v520
        %v522 = vrot.slane %v521, 4
        %v523 = vadd.f32 %v521, %v522
        %v524 = vrot.slane %v523, 2
        %v525 = vadd.f32 %v523, %v524
        %v526 = vrot.slane %v525, 1
        %v527 = vadd.f32 %v525, %v526
        %v528 = vmul.f32 %v527, %v518
        %v529 = vadd.f32 %v528, 1e-05
        %v530 = vrsqrt.pop %v529
        %v531 = vmul.f32 %v520, %v530
        %v532 = vlaneseq
        %v533 = vshrl.u32 %v532, 7
        %v534 = vsub.s32 0, %v533
        %v535 = vrot.slane %v400, %v534
        %v536 = vmul.f32 %v531, %v535
        %v537 = vlaneseq
        %v538 = vshrl.u32 %v537, 7
        %v539 = vsub.s32 1, %v538
        %v540 = vrot.slane %v400, %v539
        %v541 = vadd.f32 %v536, %v540
        %vm542 = vcmp.ge.f32.partialorder %v541, 0.0
        %v543 = vmul.f32 %v541, 0.01
        %v544 = vsel %vm542, %v541, %v543
        %v545 = vmul.f32 %v544, %v544
        %546 = vadd.xlane.f32.xlu0 %v545
        %v547 = vpop.xlane.xlu0 %546
        %v548 = vrsqrt.pop %v547
        %v549 = vmul.f32 %v544, %v548
        %550 = vst [vmem:[%s379] sm:$0xff] %v549
        %v551 = vpack.c.bf16 %v549, %v549
        %v552 = vld [vmem:[%s339] sm:$0xf]
        %v553 = vld [vmem:[%s339 + $0x4] sm:$0xf]
        %v554 = vld [vmem:[%s339 + $0x8] sm:$0xf]
        %v555 = vld [vmem:[%s339 + $0xc] sm:$0xf]
        %v556 = vld [vmem:[%s339 + $0x10] sm:$0xf]
        %v557 = vld [vmem:[%s339 + $0x14] sm:$0xf]
        %v558 = vld [vmem:[%s339 + $0x18] sm:$0xf]
        %v559 = vld [vmem:[%s339 + $0x1c] sm:$0xf]
        %v560 = vld [vmem:[%s339 + $0x20] sm:$0xf]
        %v561 = vld [vmem:[%s339 + $0x24] sm:$0xf]
        %v562 = vld [vmem:[%s339 + $0x28] sm:$0xf]
        %v563 = vld [vmem:[%s339 + $0x2c] sm:$0xf]
        %v564 = vld [vmem:[%s339 + $0x30] sm:$0xf]
        %v565 = vld [vmem:[%s339 + $0x34] sm:$0xf]
        %v566 = vld [vmem:[%s339 + $0x38] sm:$0xf]
        %v567 = vld [vmem:[%s339 + $0x3c] sm:$0xf]
        %v569 = vlaneseq
        %v570 = vshrl.u32 %v569, 7
        %v571 = vsub.s32 0, %v570
        %v572 = vrot.slane %v404, %v571
        %v590 = vunpack.c.l.b16 %v552
        %v591 = vunpack.c.l.b16 %v553
        %v592 = vunpack.c.l.b16 %v554
        %v593 = vunpack.c.l.b16 %v555
        %v594 = vunpack.c.l.b16 %v556
        %v595 = vunpack.c.l.b16 %v557
        %v596 = vunpack.c.l.b16 %v558
        %v597 = vunpack.c.l.b16 %v559
        %v598 = vunpack.c.l.b16 %v560
        %v599 = vunpack.c.l.b16 %v561
        %v600 = vunpack.c.l.b16 %v562
        %v601 = vunpack.c.l.b16 %v563
        %v602 = vunpack.c.l.b16 %v564
        %v603 = vunpack.c.l.b16 %v565
        %v604 = vunpack.c.l.b16 %v566
        %v605 = vunpack.c.l.b16 %v567
        %v606 = vpack.c.b16 %v591, %v590
        %v607 = vpack.c.b16 %v593, %v592
        %v608 = vpack.c.b16 %v595, %v594
        %v609 = vpack.c.b16 %v597, %v596
        %v610 = vpack.c.b16 %v599, %v598
        %v611 = vpack.c.b16 %v601, %v600
        %v612 = vpack.c.b16 %v603, %v602
        %v613 = vpack.c.b16 %v605, %v604
        %622 = vmatprep.subr.bf16.mxu0 0
        %623 = vmatpush1.bf16.msra.mxu0 %v606
        %624 = vmatprep.subr.bf16.mxu0 0
        %625 = vmatpush1.bf16.msra.mxu0 %v607
        %626 = vmatprep.subr.bf16.mxu0 0
        %627 = vmatpush1.bf16.msra.mxu0 %v608
        %628 = vmatprep.subr.bf16.mxu0 0
        %629 = vmatpush1.bf16.msra.mxu0 %v609
        %630 = vmatprep.subr.bf16.mxu0 0
        %631 = vmatpush1.bf16.msra.mxu0 %v610
        %632 = vmatprep.subr.bf16.mxu0 0
        %633 = vmatpush1.bf16.msra.mxu0 %v611
        %634 = vmatprep.subr.bf16.mxu0 0
        %635 = vmatpush1.bf16.msra.mxu0 %v612
        %636 = vmatprep.subr.bf16.mxu0 0
        %637 = vmatpush1.bf16.msra.mxu0 %v613
        %638 = vmatprep.subr.bf16.mxu0 0
        %639 = vmatpush1.bf16.msra.mxu0 0
        %640 = vmatprep.subr.bf16.mxu0 0
        %641 = vmatpush1.bf16.msra.mxu0 0
        %642 = vmatprep.subr.bf16.mxu0 0
        %643 = vmatpush1.bf16.msra.mxu0 0
        %644 = vmatprep.subr.bf16.mxu0 0
        %645 = vmatpush1.bf16.msra.mxu0 0
        %646 = vmatprep.subr.bf16.mxu0 0
        %647 = vmatpush1.bf16.msra.mxu0 0
        %648 = vmatprep.subr.bf16.mxu0 0
        %649 = vmatpush1.bf16.msra.mxu0 0
        %650 = vmatprep.subr.bf16.mxu0 0
        %651 = vmatpush1.bf16.msra.mxu0 0
        %652 = vmatprep.subr.bf16.mxu0 0
        %653 = vmatpush1.bf16.msra.mxu0 0
        %654 = vmatprep.mubr.bf16.mxu0 0
        %655 = vmatmul.mubr.bf16.gmra.mrb[0].mxu0 %v551
        %v656 = vpop.f32.mrb[0].mxu0
        %v657 = vadd.f32 %v572, %v656
        %v658 = vpop.f32.mrb[0].mxu0
        %v659 = vpop.f32.mrb[0].mxu0
        %v660 = vpop.f32.mrb[0].mxu0
        %661 = vdwg.mxu0
        %662 = vst [vmem:[%s386] sm:$0xff] %v657
        %s663 = scalar_lea.vmem %s321, 64 [#allocation5]
        %v664 = vld [vmem:[%s663] sm:$0xf]
        %v665 = vld [vmem:[%s663 + $0x4] sm:$0xf]
        %v666 = vld [vmem:[%s663 + $0x8] sm:$0xf]
        %v667 = vld [vmem:[%s663 + $0xc] sm:$0xf]
        %v668 = vld [vmem:[%s663 + $0x10] sm:$0xf]
        %v669 = vld [vmem:[%s663 + $0x14] sm:$0xf]
        %v670 = vld [vmem:[%s663 + $0x18] sm:$0xf]
        %v671 = vld [vmem:[%s663 + $0x1c] sm:$0xf]
        %v672 = vld [vmem:[%s663 + $0x20] sm:$0xf]
        %v673 = vld [vmem:[%s663 + $0x24] sm:$0xf]
        %v674 = vld [vmem:[%s663 + $0x28] sm:$0xf]
        %v675 = vld [vmem:[%s663 + $0x2c] sm:$0xf]
        %v676 = vld [vmem:[%s663 + $0x30] sm:$0xf]
        %v677 = vld [vmem:[%s663 + $0x34] sm:$0xf]
        %v678 = vld [vmem:[%s663 + $0x38] sm:$0xf]
        %v679 = vld [vmem:[%s663 + $0x3c] sm:$0xf]
        %v696 = vunpack.c.l.b16 %v664
        %v697 = vunpack.c.l.b16 %v665
        %v698 = vunpack.c.l.b16 %v666
        %v699 = vunpack.c.l.b16 %v667
        %v700 = vunpack.c.l.b16 %v668
        %v701 = vunpack.c.l.b16 %v669
        %v702 = vunpack.c.l.b16 %v670
        %v703 = vunpack.c.l.b16 %v671
        %v704 = vunpack.c.l.b16 %v672
        %v705 = vunpack.c.l.b16 %v673
        %v706 = vunpack.c.l.b16 %v674
        %v707 = vunpack.c.l.b16 %v675
        %v708 = vunpack.c.l.b16 %v676
        %v709 = vunpack.c.l.b16 %v677
        %v710 = vunpack.c.l.b16 %v678
        %v711 = vunpack.c.l.b16 %v679
        %v712 = vpack.c.b16 %v697, %v696
        %v713 = vpack.c.b16 %v699, %v698
        %v714 = vpack.c.b16 %v701, %v700
        %v715 = vpack.c.b16 %v703, %v702
        %v716 = vpack.c.b16 %v705, %v704
        %v717 = vpack.c.b16 %v707, %v706
        %v718 = vpack.c.b16 %v709, %v708
        %v719 = vpack.c.b16 %v711, %v710
        %728 = vmatprep.subr.bf16.mxu0 0
        %729 = vmatpush1.bf16.msra.mxu0 %v712
        %730 = vmatprep.subr.bf16.mxu0 0
        %731 = vmatpush1.bf16.msra.mxu0 %v713
        %732 = vmatprep.subr.bf16.mxu0 0
        %733 = vmatpush1.bf16.msra.mxu0 %v714
        %734 = vmatprep.subr.bf16.mxu0 0
        %735 = vmatpush1.bf16.msra.mxu0 %v715
        %736 = vmatprep.subr.bf16.mxu0 0
        %737 = vmatpush1.bf16.msra.mxu0 %v716
        %738 = vmatprep.subr.bf16.mxu0 0
        %739 = vmatpush1.bf16.msra.mxu0 %v717
        %740 = vmatprep.subr.bf16.mxu0 0
        %741 = vmatpush1.bf16.msra.mxu0 %v718
        %742 = vmatprep.subr.bf16.mxu0 0
        %743 = vmatpush1.bf16.msra.mxu0 %v719
        %744 = vmatprep.subr.bf16.mxu0 0
        %745 = vmatpush1.bf16.msra.mxu0 0
        %746 = vmatprep.subr.bf16.mxu0 0
        %747 = vmatpush1.bf16.msra.mxu0 0
        %748 = vmatprep.subr.bf16.mxu0 0
        %749 = vmatpush1.bf16.msra.mxu0 0
        %750 = vmatprep.subr.bf16.mxu0 0
        %751 = vmatpush1.bf16.msra.mxu0 0
        %752 = vmatprep.subr.bf16.mxu0 0
        %753 = vmatpush1.bf16.msra.mxu0 0
        %754 = vmatprep.subr.bf16.mxu0 0
        %755 = vmatpush1.bf16.msra.mxu0 0
        %756 = vmatprep.subr.bf16.mxu0 0
        %757 = vmatpush1.bf16.msra.mxu0 0
        %758 = vmatprep.subr.bf16.mxu0 0
        %759 = vmatpush1.bf16.msra.mxu0 0
        %760 = vmatprep.mubr.bf16.mxu0 0
        %761 = vmatmul.mubr.bf16.gmra.mrb[0].mxu0 %v399
        %v762 = vpop.f32.mrb[0].mxu0
        %v763 = vadd.f32 0.0, %v762
        %v764 = vpop.f32.mrb[0].mxu0
        %v765 = vpop.f32.mrb[0].mxu0
        %v766 = vpop.f32.mrb[0].mxu0
        %767 = vdwg.mxu0
        %v768 = vrot.slane %v763, 4
        %v769 = vadd.f32 %v763, %v768
        %v770 = vrot.slane %v769, 2
        %v771 = vadd.f32 %v769, %v770
        %v772 = vrot.slane %v771, 1
        %v773 = vadd.f32 %v771, %v772
        %v774 = vmul.f32 %v773, %v518
        %v775 = vsub.f32 %v763, %v774
        %v776 = vmul.f32 %v775, %v775
        %v777 = vrot.slane %v776, 4
        %v778 = vadd.f32 %v776, %v777
        %v779 = vrot.slane %v778, 2
        %v780 = vadd.f32 %v778, %v779
        %v781 = vrot.slane %v780, 1
        %v782 = vadd.f32 %v780, %v781
        %v783 = vmul.f32 %v782, %v518
        %v784 = vadd.f32 %v783, 1e-05
        %v785 = vrsqrt.pop %v784
        %v786 = vmul.f32 %v775, %v785
        %v787 = vlaneseq
        %v788 = vshrl.u32 %v787, 7
        %v789 = vsub.s32 0, %v788
        %v790 = vrot.slane %v401, %v789
        %v791 = vmul.f32 %v786, %v790
        %v792 = vlaneseq
        %v793 = vshrl.u32 %v792, 7
        %v794 = vsub.s32 1, %v793
        %v795 = vrot.slane %v401, %v794
        %v796 = vadd.f32 %v791, %v795
        %vm797 = vcmp.ge.f32.partialorder %v796, 0.0
        %v798 = vmul.f32 %v796, 0.01
        %v799 = vsel %vm797, %v796, %v798
        %v800 = vmul.f32 %v799, %v799
        %801 = vadd.xlane.f32.xlu0 %v800
        %v802 = vpop.xlane.xlu0 %801
        %v803 = vrsqrt.pop %v802
        %v804 = vmul.f32 %v799, %v803
        %s805 = scalar_lea.vmem %s379, 8 [#allocation10]
        %806 = vst [vmem:[%s805] sm:$0xff] %v804
        %v807 = vpack.c.bf16 %v804, %v804
        %s808 = scalar_lea.vmem %s339, 64 [#allocation8]
        %v809 = vld [vmem:[%s808] sm:$0xf]
        %v810 = vld [vmem:[%s808 + $0x4] sm:$0xf]
        %v811 = vld [vmem:[%s808 + $0x8] sm:$0xf]
        %v812 = vld [vmem:[%s808 + $0xc] sm:$0xf]
        %v813 = vld [vmem:[%s808 + $0x10] sm:$0xf]
        %v814 = vld [vmem:[%s808 + $0x14] sm:$0xf]
        %v815 = vld [vmem:[%s808 + $0x18] sm:$0xf]
        %v816 = vld [vmem:[%s808 + $0x1c] sm:$0xf]
        %v817 = vld [vmem:[%s808 + $0x20] sm:$0xf]
        %v818 = vld [vmem:[%s808 + $0x24] sm:$0xf]
        %v819 = vld [vmem:[%s808 + $0x28] sm:$0xf]
        %v820 = vld [vmem:[%s808 + $0x2c] sm:$0xf]
        %v821 = vld [vmem:[%s808 + $0x30] sm:$0xf]
        %v822 = vld [vmem:[%s808 + $0x34] sm:$0xf]
        %v823 = vld [vmem:[%s808 + $0x38] sm:$0xf]
        %v824 = vld [vmem:[%s808 + $0x3c] sm:$0xf]
        %v826 = vlaneseq
        %v827 = vshrl.u32 %v826, 7
        %v828 = vsub.s32 0, %v827
        %v829 = vrot.slane %v405, %v828
        %v847 = vunpack.c.l.b16 %v809
        %v848 = vunpack.c.l.b16 %v810
        %v849 = vunpack.c.l.b16 %v811
        %v850 = vunpack.c.l.b16 %v812
        %v851 = vunpack.c.l.b16 %v813
        %v852 = vunpack.c.l.b16 %v814
        %v853 = vunpack.c.l.b16 %v815
        %v854 = vunpack.c.l.b16 %v816
        %v855 = vunpack.c.l.b16 %v817
        %v856 = vunpack.c.l.b16 %v818
        %v857 = vunpack.c.l.b16 %v819
        %v858 = vunpack.c.l.b16 %v820
        %v859 = vunpack.c.l.b16 %v821
        %v860 = vunpack.c.l.b16 %v822
        %v861 = vunpack.c.l.b16 %v823
        %v862 = vunpack.c.l.b16 %v824
        %v863 = vpack.c.b16 %v848, %v847
        %v864 = vpack.c.b16 %v850, %v849
        %v865 = vpack.c.b16 %v852, %v851
        %v866 = vpack.c.b16 %v854, %v853
        %v867 = vpack.c.b16 %v856, %v855
        %v868 = vpack.c.b16 %v858, %v857
        %v869 = vpack.c.b16 %v860, %v859
        %v870 = vpack.c.b16 %v862, %v861
        %879 = vmatprep.subr.bf16.mxu0 0
        %880 = vmatpush1.bf16.msra.mxu0 %v863
        %881 = vmatprep.subr.bf16.mxu0 0
        %882 = vmatpush1.bf16.msra.mxu0 %v864
        %883 = vmatprep.subr.bf16.mxu0 0
        %884 = vmatpush1.bf16.msra.mxu0 %v865
        %885 = vmatprep.subr.bf16.mxu0 0
        %886 = vmatpush1.bf16.msra.mxu0 %v866
        %887 = vmatprep.subr.bf16.mxu0 0
        %888 = vmatpush1.bf16.msra.mxu0 %v867
        %889 = vmatprep.subr.bf16.mxu0 0
        %890 = vmatpush1.bf16.msra.mxu0 %v868
        %891 = vmatprep.subr.bf16.mxu0 0
        %892 = vmatpush1.bf16.msra.mxu0 %v869
        %893 = vmatprep.subr.bf16.mxu0 0
        %894 = vmatpush1.bf16.msra.mxu0 %v870
        %895 = vmatprep.subr.bf16.mxu0 0
        %896 = vmatpush1.bf16.msra.mxu0 0
        %897 = vmatprep.subr.bf16.mxu0 0
        %898 = vmatpush1.bf16.msra.mxu0 0
        %899 = vmatprep.subr.bf16.mxu0 0
        %900 = vmatpush1.bf16.msra.mxu0 0
        %901 = vmatprep.subr.bf16.mxu0 0
        %902 = vmatpush1.bf16.msra.mxu0 0
        %903 = vmatprep.subr.bf16.mxu0 0
        %904 = vmatpush1.bf16.msra.mxu0 0
        %905 = vmatprep.subr.bf16.mxu0 0
        %906 = vmatpush1.bf16.msra.mxu0 0
        %907 = vmatprep.subr.bf16.mxu0 0
        %908 = vmatpush1.bf16.msra.mxu0 0
        %909 = vmatprep.subr.bf16.mxu0 0
        %910 = vmatpush1.bf16.msra.mxu0 0
        %911 = vmatprep.mubr.bf16.mxu0 0
        %912 = vmatmul.mubr.bf16.gmra.mrb[0].mxu0 %v807
        %v913 = vpop.f32.mrb[0].mxu0
        %v914 = vadd.f32 %v829, %v913
        %v915 = vpop.f32.mrb[0].mxu0
        %v916 = vpop.f32.mrb[0].mxu0
        %v917 = vpop.f32.mrb[0].mxu0
        %918 = vdwg.mxu0
        %s919 = scalar_lea.vmem %s386, 8 [#allocation11]
        %920 = vst [vmem:[%s919] sm:$0xff] %v914
        %s921 = scalar_lea.vmem %s321, 128 [#allocation5]
        %v922 = vld [vmem:[%s921] sm:$0xf]
        %v923 = vld [vmem:[%s921 + $0x4] sm:$0xf]
        %v924 = vld [vmem:[%s921 + $0x8] sm:$0xf]
        %v925 = vld [vmem:[%s921 + $0xc] sm:$0xf]
        %v926 = vld [vmem:[%s921 + $0x10] sm:$0xf]
        %v927 = vld [vmem:[%s921 + $0x14] sm:$0xf]
        %v928 = vld [vmem:[%s921 + $0x18] sm:$0xf]
        %v929 = vld [vmem:[%s921 + $0x1c] sm:$0xf]
        %v930 = vld [vmem:[%s921 + $0x20] sm:$0xf]
        %v931 = vld [vmem:[%s921 + $0x24] sm:$0xf]
        %v932 = vld [vmem:[%s921 + $0x28] sm:$0xf]
        %v933 = vld [vmem:[%s921 + $0x2c] sm:$0xf]
        %v934 = vld [vmem:[%s921 + $0x30] sm:$0xf]
        %v935 = vld [vmem:[%s921 + $0x34] sm:$0xf]
        %v936 = vld [vmem:[%s921 + $0x38] sm:$0xf]
        %v937 = vld [vmem:[%s921 + $0x3c] sm:$0xf]
        %v954 = vunpack.c.l.b16 %v922
        %v955 = vunpack.c.l.b16 %v923
        %v956 = vunpack.c.l.b16 %v924
        %v957 = vunpack.c.l.b16 %v925
        %v958 = vunpack.c.l.b16 %v926
        %v959 = vunpack.c.l.b16 %v927
        %v960 = vunpack.c.l.b16 %v928
        %v961 = vunpack.c.l.b16 %v929
        %v962 = vunpack.c.l.b16 %v930
        %v963 = vunpack.c.l.b16 %v931
        %v964 = vunpack.c.l.b16 %v932
        %v965 = vunpack.c.l.b16 %v933
        %v966 = vunpack.c.l.b16 %v934
        %v967 = vunpack.c.l.b16 %v935
        %v968 = vunpack.c.l.b16 %v936
        %v969 = vunpack.c.l.b16 %v937
        %v970 = vpack.c.b16 %v955, %v954
        %v971 = vpack.c.b16 %v957, %v956
        %v972 = vpack.c.b16 %v959, %v958
        %v973 = vpack.c.b16 %v961, %v960
        %v974 = vpack.c.b16 %v963, %v962
        %v975 = vpack.c.b16 %v965, %v964
        %v976 = vpack.c.b16 %v967, %v966
        %v977 = vpack.c.b16 %v969, %v968
        %986 = vmatprep.subr.bf16.mxu0 0
        %987 = vmatpush1.bf16.msra.mxu0 %v970
        %988 = vmatprep.subr.bf16.mxu0 0
        %989 = vmatpush1.bf16.msra.mxu0 %v971
        %990 = vmatprep.subr.bf16.mxu0 0
        %991 = vmatpush1.bf16.msra.mxu0 %v972
        %992 = vmatprep.subr.bf16.mxu0 0
        %993 = vmatpush1.bf16.msra.mxu0 %v973
        %994 = vmatprep.subr.bf16.mxu0 0
        %995 = vmatpush1.bf16.msra.mxu0 %v974
        %996 = vmatprep.subr.bf16.mxu0 0
        %997 = vmatpush1.bf16.msra.mxu0 %v975
        %998 = vmatprep.subr.bf16.mxu0 0
        %999 = vmatpush1.bf16.msra.mxu0 %v976
        %1000 = vmatprep.subr.bf16.mxu0 0
        %1001 = vmatpush1.bf16.msra.mxu0 %v977
        %1002 = vmatprep.subr.bf16.mxu0 0
        %1003 = vmatpush1.bf16.msra.mxu0 0
        %1004 = vmatprep.subr.bf16.mxu0 0
        %1005 = vmatpush1.bf16.msra.mxu0 0
        %1006 = vmatprep.subr.bf16.mxu0 0
        %1007 = vmatpush1.bf16.msra.mxu0 0
        %1008 = vmatprep.subr.bf16.mxu0 0
        %1009 = vmatpush1.bf16.msra.mxu0 0
        %1010 = vmatprep.subr.bf16.mxu0 0
        %1011 = vmatpush1.bf16.msra.mxu0 0
        %1012 = vmatprep.subr.bf16.mxu0 0
        %1013 = vmatpush1.bf16.msra.mxu0 0
        %1014 = vmatprep.subr.bf16.mxu0 0
        %1015 = vmatpush1.bf16.msra.mxu0 0
        %1016 = vmatprep.subr.bf16.mxu0 0
        %1017 = vmatpush1.bf16.msra.mxu0 0
        %1018 = vmatprep.mubr.bf16.mxu0 0
        %1019 = vmatmul.mubr.bf16.gmra.mrb[0].mxu0 %v399
        %v1020 = vpop.f32.mrb[0].mxu0
        %v1021 = vadd.f32 0.0, %v1020
        %v1022 = vpop.f32.mrb[0].mxu0
        %v1023 = vpop.f32.mrb[0].mxu0
        %v1024 = vpop.f32.mrb[0].mxu0
        %1025 = vdwg.mxu0
        %v1026 = vrot.slane %v1021, 4
        %v1027 = vadd.f32 %v1021, %v1026
        %v1028 = vrot.slane %v1027, 2
        %v1029 = vadd.f32 %v1027, %v1028
        %v1030 = vrot.slane %v1029, 1
        %v1031 = vadd.f32 %v1029, %v1030
        %v1032 = vmul.f32 %v1031, %v518
        %v1033 = vsub.f32 %v1021, %v1032
        %v1034 = vmul.f32 %v1033, %v1033
        %v1035 = vrot.slane %v1034, 4
        %v1036 = vadd.f32 %v1034, %v1035
        %v1037 = vrot.slane %v1036, 2
        %v1038 = vadd.f32 %v1036, %v1037
        %v1039 = vrot.slane %v1038, 1
        %v1040 = vadd.f32 %v1038, %v1039
        %v1041 = vmul.f32 %v1040, %v518
        %v1042 = vadd.f32 %v1041, 1e-05
        %v1043 = vrsqrt.pop %v1042
        %v1044 = vmul.f32 %v1033, %v1043
        %v1045 = vlaneseq
        %v1046 = vshrl.u32 %v1045, 7
        %v1047 = vsub.s32 0, %v1046
        %v1048 = vrot.slane %v402, %v1047
        %v1049 = vmul.f32 %v1044, %v1048
        %v1050 = vlaneseq
        %v1051 = vshrl.u32 %v1050, 7
        %v1052 = vsub.s32 1, %v1051
        %v1053 = vrot.slane %v402, %v1052
        %v1054 = vadd.f32 %v1049, %v1053
        %vm1055 = vcmp.ge.f32.partialorder %v1054, 0.0
        %v1056 = vmul.f32 %v1054, 0.01
        %v1057 = vsel %vm1055, %v1054, %v1056
        %v1058 = vmul.f32 %v1057, %v1057
        %1059 = vadd.xlane.f32.xlu0 %v1058
        %v1060 = vpop.xlane.xlu0 %1059
        %v1061 = vrsqrt.pop %v1060
        %v1062 = vmul.f32 %v1057, %v1061
        %s1063 = scalar_lea.vmem %s379, 16 [#allocation10]
        %1064 = vst [vmem:[%s1063] sm:$0xff] %v1062
        %v1065 = vpack.c.bf16 %v1062, %v1062
        %s1066 = scalar_lea.vmem %s339, 128 [#allocation8]
        %v1067 = vld [vmem:[%s1066] sm:$0xf]
        %v1068 = vld [vmem:[%s1066 + $0x4] sm:$0xf]
        %v1069 = vld [vmem:[%s1066 + $0x8] sm:$0xf]
        %v1070 = vld [vmem:[%s1066 + $0xc] sm:$0xf]
        %v1071 = vld [vmem:[%s1066 + $0x10] sm:$0xf]
        %v1072 = vld [vmem:[%s1066 + $0x14] sm:$0xf]
        %v1073 = vld [vmem:[%s1066 + $0x18] sm:$0xf]
        %v1074 = vld [vmem:[%s1066 + $0x1c] sm:$0xf]
        %v1075 = vld [vmem:[%s1066 + $0x20] sm:$0xf]
        %v1076 = vld [vmem:[%s1066 + $0x24] sm:$0xf]
        %v1077 = vld [vmem:[%s1066 + $0x28] sm:$0xf]
        %v1078 = vld [vmem:[%s1066 + $0x2c] sm:$0xf]
        %v1079 = vld [vmem:[%s1066 + $0x30] sm:$0xf]
        %v1080 = vld [vmem:[%s1066 + $0x34] sm:$0xf]
        %v1081 = vld [vmem:[%s1066 + $0x38] sm:$0xf]
        %v1082 = vld [vmem:[%s1066 + $0x3c] sm:$0xf]
        %v1084 = vlaneseq
        %v1085 = vshrl.u32 %v1084, 7
        %v1086 = vsub.s32 0, %v1085
        %v1087 = vrot.slane %v406, %v1086
        %v1105 = vunpack.c.l.b16 %v1067
        %v1106 = vunpack.c.l.b16 %v1068
        %v1107 = vunpack.c.l.b16 %v1069
        %v1108 = vunpack.c.l.b16 %v1070
        %v1109 = vunpack.c.l.b16 %v1071
        %v1110 = vunpack.c.l.b16 %v1072
        %v1111 = vunpack.c.l.b16 %v1073
        %v1112 = vunpack.c.l.b16 %v1074
        %v1113 = vunpack.c.l.b16 %v1075
        %v1114 = vunpack.c.l.b16 %v1076
        %v1115 = vunpack.c.l.b16 %v1077
        %v1116 = vunpack.c.l.b16 %v1078
        %v1117 = vunpack.c.l.b16 %v1079
        %v1118 = vunpack.c.l.b16 %v1080
        %v1119 = vunpack.c.l.b16 %v1081
        %v1120 = vunpack.c.l.b16 %v1082
        %v1121 = vpack.c.b16 %v1106, %v1105
        %v1122 = vpack.c.b16 %v1108, %v1107
        %v1123 = vpack.c.b16 %v1110, %v1109
        %v1124 = vpack.c.b16 %v1112, %v1111
        %v1125 = vpack.c.b16 %v1114, %v1113
        %v1126 = vpack.c.b16 %v1116, %v1115
        %v1127 = vpack.c.b16 %v1118, %v1117
        %v1128 = vpack.c.b16 %v1120, %v1119
        %1137 = vmatprep.subr.bf16.mxu0 0
        %1138 = vmatpush1.bf16.msra.mxu0 %v1121
        %1139 = vmatprep.subr.bf16.mxu0 0
        %1140 = vmatpush1.bf16.msra.mxu0 %v1122
        %1141 = vmatprep.subr.bf16.mxu0 0
        %1142 = vmatpush1.bf16.msra.mxu0 %v1123
        %1143 = vmatprep.subr.bf16.mxu0 0
        %1144 = vmatpush1.bf16.msra.mxu0 %v1124
        %1145 = vmatprep.subr.bf16.mxu0 0
        %1146 = vmatpush1.bf16.msra.mxu0 %v1125
        %1147 = vmatprep.subr.bf16.mxu0 0
        %1148 = vmatpush1.bf16.msra.mxu0 %v1126
        %1149 = vmatprep.subr.bf16.mxu0 0
        %1150 = vmatpush1.bf16.msra.mxu0 %v1127
        %1151 = vmatprep.subr.bf16.mxu0 0
        %1152 = vmatpush1.bf16.msra.mxu0 %v1128
        %1153 = vmatprep.subr.bf16.mxu0 0
        %1154 = vmatpush1.bf16.msra.mxu0 0
        %1155 = vmatprep.subr.bf16.mxu0 0
        %1156 = vmatpush1.bf16.msra.mxu0 0
        %1157 = vmatprep.subr.bf16.mxu0 0
        %1158 = vmatpush1.bf16.msra.mxu0 0
        %1159 = vmatprep.subr.bf16.mxu0 0
        %1160 = vmatpush1.bf16.msra.mxu0 0
        %1161 = vmatprep.subr.bf16.mxu0 0
        %1162 = vmatpush1.bf16.msra.mxu0 0
        %1163 = vmatprep.subr.bf16.mxu0 0
        %1164 = vmatpush1.bf16.msra.mxu0 0
        %1165 = vmatprep.subr.bf16.mxu0 0
        %1166 = vmatpush1.bf16.msra.mxu0 0
        %1167 = vmatprep.subr.bf16.mxu0 0
        %1168 = vmatpush1.bf16.msra.mxu0 0
        %1169 = vmatprep.mubr.bf16.mxu0 0
        %1170 = vmatmul.mubr.bf16.gmra.mrb[0].mxu0 %v1065
        %v1171 = vpop.f32.mrb[0].mxu0
        %v1172 = vadd.f32 %v1087, %v1171
        %v1173 = vpop.f32.mrb[0].mxu0
        %v1174 = vpop.f32.mrb[0].mxu0
        %v1175 = vpop.f32.mrb[0].mxu0
        %1176 = vdwg.mxu0
        %s1177 = scalar_lea.vmem %s386, 16 [#allocation11]
        %1178 = vst [vmem:[%s1177] sm:$0xff] %v1172
        %s1179 = scalar_lea.vmem %s321, 192 [#allocation5]
        %v1180 = vld [vmem:[%s1179] sm:$0xf]
        %v1181 = vld [vmem:[%s1179 + $0x4] sm:$0xf]
        %v1182 = vld [vmem:[%s1179 + $0x8] sm:$0xf]
        %v1183 = vld [vmem:[%s1179 + $0xc] sm:$0xf]
        %v1184 = vld [vmem:[%s1179 + $0x10] sm:$0xf]
        %v1185 = vld [vmem:[%s1179 + $0x14] sm:$0xf]
        %v1186 = vld [vmem:[%s1179 + $0x18] sm:$0xf]
        %v1187 = vld [vmem:[%s1179 + $0x1c] sm:$0xf]
        %v1188 = vld [vmem:[%s1179 + $0x20] sm:$0xf]
        %v1189 = vld [vmem:[%s1179 + $0x24] sm:$0xf]
        %v1190 = vld [vmem:[%s1179 + $0x28] sm:$0xf]
        %v1191 = vld [vmem:[%s1179 + $0x2c] sm:$0xf]
        %v1192 = vld [vmem:[%s1179 + $0x30] sm:$0xf]
        %v1193 = vld [vmem:[%s1179 + $0x34] sm:$0xf]
        %v1194 = vld [vmem:[%s1179 + $0x38] sm:$0xf]
        %v1195 = vld [vmem:[%s1179 + $0x3c] sm:$0xf]
        %v1212 = vunpack.c.l.b16 %v1180
        %v1213 = vunpack.c.l.b16 %v1181
        %v1214 = vunpack.c.l.b16 %v1182
        %v1215 = vunpack.c.l.b16 %v1183
        %v1216 = vunpack.c.l.b16 %v1184
        %v1217 = vunpack.c.l.b16 %v1185
        %v1218 = vunpack.c.l.b16 %v1186
        %v1219 = vunpack.c.l.b16 %v1187
        %v1220 = vunpack.c.l.b16 %v1188
        %v1221 = vunpack.c.l.b16 %v1189
        %v1222 = vunpack.c.l.b16 %v1190
        %v1223 = vunpack.c.l.b16 %v1191
        %v1224 = vunpack.c.l.b16 %v1192
        %v1225 = vunpack.c.l.b16 %v1193
        %v1226 = vunpack.c.l.b16 %v1194
        %v1227 = vunpack.c.l.b16 %v1195
        %v1228 = vpack.c.b16 %v1213, %v1212
        %v1229 = vpack.c.b16 %v1215, %v1214
        %v1230 = vpack.c.b16 %v1217, %v1216
        %v1231 = vpack.c.b16 %v1219, %v1218
        %v1232 = vpack.c.b16 %v1221, %v1220
        %v1233 = vpack.c.b16 %v1223, %v1222
        %v1234 = vpack.c.b16 %v1225, %v1224
        %v1235 = vpack.c.b16 %v1227, %v1226
        %1244 = vmatprep.subr.bf16.mxu0 0
        %1245 = vmatpush1.bf16.msra.mxu0 %v1228
        %1246 = vmatprep.subr.bf16.mxu0 0
        %1247 = vmatpush1.bf16.msra.mxu0 %v1229
        %1248 = vmatprep.subr.bf16.mxu0 0
        %1249 = vmatpush1.bf16.msra.mxu0 %v1230
        %1250 = vmatprep.subr.bf16.mxu0 0
        %1251 = vmatpush1.bf16.msra.mxu0 %v1231
        %1252 = vmatprep.subr.bf16.mxu0 0
        %1253 = vmatpush1.bf16.msra.mxu0 %v1232
        %1254 = vmatprep.subr.bf16.mxu0 0
        %1255 = vmatpush1.bf16.msra.mxu0 %v1233
        %1256 = vmatprep.subr.bf16.mxu0 0
        %1257 = vmatpush1.bf16.msra.mxu0 %v1234
        %1258 = vmatprep.subr.bf16.mxu0 0
        %1259 = vmatpush1.bf16.msra.mxu0 %v1235
        %1260 = vmatprep.subr.bf16.mxu0 0
        %1261 = vmatpush1.bf16.msra.mxu0 0
        %1262 = vmatprep.subr.bf16.mxu0 0
        %1263 = vmatpush1.bf16.msra.mxu0 0
        %1264 = vmatprep.subr.bf16.mxu0 0
        %1265 = vmatpush1.bf16.msra.mxu0 0
        %1266 = vmatprep.subr.bf16.mxu0 0
        %1267 = vmatpush1.bf16.msra.mxu0 0
        %1268 = vmatprep.subr.bf16.mxu0 0
        %1269 = vmatpush1.bf16.msra.mxu0 0
        %1270 = vmatprep.subr.bf16.mxu0 0
        %1271 = vmatpush1.bf16.msra.mxu0 0
        %1272 = vmatprep.subr.bf16.mxu0 0
        %1273 = vmatpush1.bf16.msra.mxu0 0
        %1274 = vmatprep.subr.bf16.mxu0 0
        %1275 = vmatpush1.bf16.msra.mxu0 0
        %1276 = vmatprep.mubr.bf16.mxu0 0
        %1277 = vmatmul.mubr.bf16.gmra.mrb[0].mxu0 %v399
        %v1278 = vpop.f32.mrb[0].mxu0
        %v1279 = vadd.f32 0.0, %v1278
        %v1280 = vpop.f32.mrb[0].mxu0
        %v1281 = vpop.f32.mrb[0].mxu0
        %v1282 = vpop.f32.mrb[0].mxu0
        %1283 = vdwg.mxu0
        %v1284 = vrot.slane %v1279, 4
        %v1285 = vadd.f32 %v1279, %v1284
        %v1286 = vrot.slane %v1285, 2
        %v1287 = vadd.f32 %v1285, %v1286
        %v1288 = vrot.slane %v1287, 1
        %v1289 = vadd.f32 %v1287, %v1288
        %v1290 = vmul.f32 %v1289, %v518
        %v1291 = vsub.f32 %v1279, %v1290
        %v1292 = vmul.f32 %v1291, %v1291
        %v1293 = vrot.slane %v1292, 4
        %v1294 = vadd.f32 %v1292, %v1293
        %v1295 = vrot.slane %v1294, 2
        %v1296 = vadd.f32 %v1294, %v1295
        %v1297 = vrot.slane %v1296, 1
        %v1298 = vadd.f32 %v1296, %v1297
        %v1299 = vmul.f32 %v1298, %v518
        %v1300 = vadd.f32 %v1299, 1e-05
        %v1301 = vrsqrt.pop %v1300
        %v1302 = vmul.f32 %v1291, %v1301
        %v1303 = vlaneseq
        %v1304 = vshrl.u32 %v1303, 7
        %v1305 = vsub.s32 0, %v1304
        %v1306 = vrot.slane %v403, %v1305
        %v1307 = vmul.f32 %v1302, %v1306
        %v1308 = vlaneseq
        %v1309 = vshrl.u32 %v1308, 7
        %v1310 = vsub.s32 1, %v1309
        %v1311 = vrot.slane %v403, %v1310
        %v1312 = vadd.f32 %v1307, %v1311
        %vm1313 = vcmp.ge.f32.partialorder %v1312, 0.0
        %v1314 = vmul.f32 %v1312, 0.01
        %v1315 = vsel %vm1313, %v1312, %v1314
        %v1316 = vmul.f32 %v1315, %v1315
        %1317 = vadd.xlane.f32.xlu0 %v1316
        %v1318 = vpop.xlane.xlu0 %1317
        %v1319 = vrsqrt.pop %v1318
        %v1320 = vmul.f32 %v1315, %v1319
        %s1321 = scalar_lea.vmem %s379, 24 [#allocation10]
        %1322 = vst [vmem:[%s1321] sm:$0xff] %v1320
        %v1323 = vpack.c.bf16 %v1320, %v1320
        %s1324 = scalar_lea.vmem %s339, 192 [#allocation8]
        %v1325 = vld [vmem:[%s1324] sm:$0xf]
        %v1326 = vld [vmem:[%s1324 + $0x4] sm:$0xf]
        %v1327 = vld [vmem:[%s1324 + $0x8] sm:$0xf]
        %v1328 = vld [vmem:[%s1324 + $0xc] sm:$0xf]
        %v1329 = vld [vmem:[%s1324 + $0x10] sm:$0xf]
        %v1330 = vld [vmem:[%s1324 + $0x14] sm:$0xf]
        %v1331 = vld [vmem:[%s1324 + $0x18] sm:$0xf]
        %v1332 = vld [vmem:[%s1324 + $0x1c] sm:$0xf]
        %v1333 = vld [vmem:[%s1324 + $0x20] sm:$0xf]
        %v1334 = vld [vmem:[%s1324 + $0x24] sm:$0xf]
        %v1335 = vld [vmem:[%s1324 + $0x28] sm:$0xf]
        %v1336 = vld [vmem:[%s1324 + $0x2c] sm:$0xf]
        %v1337 = vld [vmem:[%s1324 + $0x30] sm:$0xf]
        %v1338 = vld [vmem:[%s1324 + $0x34] sm:$0xf]
        %v1339 = vld [vmem:[%s1324 + $0x38] sm:$0xf]
        %v1340 = vld [vmem:[%s1324 + $0x3c] sm:$0xf]
        %v1342 = vlaneseq
        %v1343 = vshrl.u32 %v1342, 7
        %v1344 = vsub.s32 0, %v1343
        %v1345 = vrot.slane %v407, %v1344
        %v1363 = vunpack.c.l.b16 %v1325
        %v1364 = vunpack.c.l.b16 %v1326
        %v1365 = vunpack.c.l.b16 %v1327
        %v1366 = vunpack.c.l.b16 %v1328
        %v1367 = vunpack.c.l.b16 %v1329
        %v1368 = vunpack.c.l.b16 %v1330
        %v1369 = vunpack.c.l.b16 %v1331
        %v1370 = vunpack.c.l.b16 %v1332
        %v1371 = vunpack.c.l.b16 %v1333
        %v1372 = vunpack.c.l.b16 %v1334
        %v1373 = vunpack.c.l.b16 %v1335
        %v1374 = vunpack.c.l.b16 %v1336
        %v1375 = vunpack.c.l.b16 %v1337
        %v1376 = vunpack.c.l.b16 %v1338
        %v1377 = vunpack.c.l.b16 %v1339
        %v1378 = vunpack.c.l.b16 %v1340
        %v1379 = vpack.c.b16 %v1364, %v1363
        %v1380 = vpack.c.b16 %v1366, %v1365
        %v1381 = vpack.c.b16 %v1368, %v1367
        %v1382 = vpack.c.b16 %v1370, %v1369
        %v1383 = vpack.c.b16 %v1372, %v1371
        %v1384 = vpack.c.b16 %v1374, %v1373
        %v1385 = vpack.c.b16 %v1376, %v1375
        %v1386 = vpack.c.b16 %v1378, %v1377
        %1395 = vmatprep.subr.bf16.mxu0 0
        %1396 = vmatpush1.bf16.msra.mxu0 %v1379
        %1397 = vmatprep.subr.bf16.mxu0 0
        %1398 = vmatpush1.bf16.msra.mxu0 %v1380
        %1399 = vmatprep.subr.bf16.mxu0 0
        %1400 = vmatpush1.bf16.msra.mxu0 %v1381
        %1401 = vmatprep.subr.bf16.mxu0 0
        %1402 = vmatpush1.bf16.msra.mxu0 %v1382
        %1403 = vmatprep.subr.bf16.mxu0 0
        %1404 = vmatpush1.bf16.msra.mxu0 %v1383
        %1405 = vmatprep.subr.bf16.mxu0 0
        %1406 = vmatpush1.bf16.msra.mxu0 %v1384
        %1407 = vmatprep.subr.bf16.mxu0 0
        %1408 = vmatpush1.bf16.msra.mxu0 %v1385
        %1409 = vmatprep.subr.bf16.mxu0 0
        %1410 = vmatpush1.bf16.msra.mxu0 %v1386
        %1411 = vmatprep.subr.bf16.mxu0 0
        %1412 = vmatpush1.bf16.msra.mxu0 0
        %1413 = vmatprep.subr.bf16.mxu0 0
        %1414 = vmatpush1.bf16.msra.mxu0 0
        %1415 = vmatprep.subr.bf16.mxu0 0
        %1416 = vmatpush1.bf16.msra.mxu0 0
        %1417 = vmatprep.subr.bf16.mxu0 0
        %1418 = vmatpush1.bf16.msra.mxu0 0
        %1419 = vmatprep.subr.bf16.mxu0 0
        %1420 = vmatpush1.bf16.msra.mxu0 0
        %1421 = vmatprep.subr.bf16.mxu0 0
        %1422 = vmatpush1.bf16.msra.mxu0 0
        %1423 = vmatprep.subr.bf16.mxu0 0
        %1424 = vmatpush1.bf16.msra.mxu0 0
        %1425 = vmatprep.subr.bf16.mxu0 0
        %1426 = vmatpush1.bf16.msra.mxu0 0
        %1427 = vmatprep.mubr.bf16.mxu0 0
        %1428 = vmatmul.mubr.bf16.gmra.mrb[0].mxu0 %v1323
        %v1429 = vpop.f32.mrb[0].mxu0
        %v1430 = vadd.f32 %v1345, %v1429
        %v1431 = vpop.f32.mrb[0].mxu0
        %v1432 = vpop.f32.mrb[0].mxu0
        %v1433 = vpop.f32.mrb[0].mxu0
        %1434 = vdwg.mxu0
        %s1435 = scalar_lea.vmem %s386, 24 [#allocation11]
        %1436 = vst [vmem:[%s1435] sm:$0xff] %v1430
        %s1437 = sand.u32 %s164, 1
        %s1438 = scalar_lea.sflag [#allocation4], %s1437
        %s1439 = sand.u32 %s164, 1
        %s1440 = smul.addr %s1439, 32
        %s1441 = scalar_lea.vmem [#allocation10], %s1440
        %s1442 = sand.u32 %s190, 1
        %s1443 = scalar_lea.sflag [#allocation12], %s1442
        %s1444 = sand.u32 %s190, 1
        %s1445 = smul.addr %s1444, 32
        %s1446 = scalar_lea.vmem [#allocation11], %s1445
        // Predicated region
        $region57: #{tpu_custom_call.1} parent=39 // pred_check
          %p1447 = pneg %p174
        $region58: #{tpu_custom_call.1} parent=39 // pred_check_branch
          %1449 = sbr.rel (%p1447) target = $region60
        $region59: #{tpu_custom_call.1} parent=39 // pred_region
          %s1450 = smul.u32 4, %s31
          %s1452 = ssub.s32 512, 512
          %1453 = vsyncadd %s1438, %s1452
          %s1454 = smul.addr %s1450, 128
          %s1455 = scalar_lea.hbm %s5, %s1454
          %s1456 = sshll.u32 %s1441, 4
          %s1457 = int_to_ptr.vmem [resolvable:$true] %s1456
          %1462 = dma.vmem_to_hbm [thread:$0]  %s1457, 512, %s1455, %s1438, 128, 128, 8
        $region60: #{tpu_custom_call.1} parent=39 // pred_fallthru
          _
        // Predicated region
        $region61: #{tpu_custom_call.1} parent=39 // pred_check
          %p1463 = pneg %p200
        $region62: #{tpu_custom_call.1} parent=39 // pred_check_branch
          %1465 = sbr.rel (%p1463) target = $region64
        $region63: #{tpu_custom_call.1} parent=39 // pred_region
          %s1466 = smul.u32 4, %s31
          %s1468 = ssub.s32 512, 512
          %1469 = vsyncadd %s1443, %s1468
          %s1470 = smul.addr %s1466, 128
          %s1471 = scalar_lea.hbm %s6, %s1470
          %s1472 = sshll.u32 %s1446, 4
          %s1473 = int_to_ptr.vmem [resolvable:$true] %s1472
          %1478 = dma.vmem_to_hbm [thread:$0]  %s1473, 512, %s1471, %s1443, 128, 128, 8
        $region64: #{tpu_custom_call.1} parent=39 // pred_fallthru
          _
      $region40: #{tpu_custom_call.1} parent=5 // pred_fallthru
        _
      %p1479 = scmp.le.s32.totalorder 2, %s26
      // Predicated region
      $region65: #{tpu_custom_call.1} parent=5 // pred_check
        %p1480 = pneg %p1479
      $region66: #{tpu_custom_call.1} parent=5 // pred_check_branch
        %1482 = sbr.rel (%p1480) target = $region68
      $region67: #{tpu_custom_call.1} parent=5 // pred_region
        %s1483 = ssub.s32 %s26, 2
        // Predicated region
        $region69: #{tpu_custom_call.1} parent=67 // pred_check
          %p1484 = pneg %p180
        $region70: #{tpu_custom_call.1} parent=67 // pred_check_branch
          %1486 = sbr.rel (%p1484) target = $region72
        $region71: #{tpu_custom_call.1} parent=67 // pred_region
          %s1487 = sand.u32 %s165, 1
          %s1488 = scalar_lea.sflag [#allocation4], %s1487
          %s1489 = sand.u32 %s165, 1
          %s1490 = smul.addr %s1489, 32
          %s1491 = scalar_lea.vmem [#allocation10], %s1490
          %1492 = dma.done %s1488, 512
        $region72: #{tpu_custom_call.1} parent=67 // pred_fallthru
          _
        // Predicated region
        $region73: #{tpu_custom_call.1} parent=67 // pred_check
          %p1493 = pneg %p206
        $region74: #{tpu_custom_call.1} parent=67 // pred_check_branch
          %1495 = sbr.rel (%p1493) target = $region76
        $region75: #{tpu_custom_call.1} parent=67 // pred_region
          %s1496 = sand.u32 %s191, 1
          %s1497 = scalar_lea.sflag [#allocation12], %s1496
          %s1498 = sand.u32 %s191, 1
          %s1499 = smul.addr %s1498, 32
          %s1500 = scalar_lea.vmem [#allocation11], %s1499
          %1501 = dma.done %s1497, 512
        $region76: #{tpu_custom_call.1} parent=67 // pred_fallthru
          _
      $region68: #{tpu_custom_call.1} parent=5 // pred_fallthru
        _
    $region6: #{tpu_custom_call.1} parent=1 // loop_footer
      %s30 = sadd.s32 1, %s26
    $region7: #{tpu_custom_call.1} parent=1 // loop_footer_branch
      %25 = sbr.rel target = $region3
    $region8: #{tpu_custom_call.1} parent=1 // loop_exit
      _
    %1502 = vsyncpa [#allocation3], 1
    %s1503 = scalar_lea.sflag [#allocation3], 1
    %1504 = vsyncpa %s1503, 1
    %1505 = vsyncpa [#allocation6], 1
    %s1506 = scalar_lea.sflag [#allocation6], 1
    %1507 = vsyncpa %s1506, 1
    %1508 = vsyncpa [#allocation9], 1
    %s1509 = scalar_lea.sflag [#allocation9], 1
    %1510 = vsyncpa %s1509, 1
    %1511 = vsyncpa [#allocation4], 1
    %s1512 = scalar_lea.sflag [#allocation4], 1
    %1513 = vsyncpa %s1512, 1
    %1514 = vsyncpa [#allocation12], 1
    %s1515 = scalar_lea.sflag [#allocation12], 1
    %1516 = vsyncpa %s1515, 1

</llo_original>
